<compile_context>
chip_gen: v6e
topology: v6e:2x2x1
jax: 0.10.0
libtpu: 0.0.40
codegen_flags: <defaults>
</compile_context>

<pallas_src>
import functools

import jax
import jax.numpy as jnp
from jax import lax
from jax.experimental import pallas as pl
from jax.experimental.pallas import tpu as pltpu

_LANE = 128


def _round_up(x, m):
    return (x + m - 1) // m * m


def _vmem_limit_bytes():
    """Scoped-VMEM limit derived from the actual chip (v7x: 64 MiB/TC)."""
    try:
        info = pltpu.get_tpu_info()
        cap = getattr(info, "vmem_capacity_bytes", None)
        if cap:
            return int(max(32 << 20, min(cap - (16 << 20), 100 << 20)))
    except Exception:
        pass
    return 48 << 20


# ------------------------- fused decoder-step kernel -------------------------
def _decoder_step_kernel(*refs, num_layers, hidden_pad, seq_len):
    # refs layout:
    #   inputs : emb(B,Ep) h(L,B,Hp) c(L,B,Hp) enc_hbm(B,Sp,Hp bf16, ANY)
    #            [W_l(in_p+Hp,4Hp) bf16, b_l(1,4Hp) f32] * L
    #            wc(2Hp,Hp) bf16  bc(1,Hp) f32  wfc(Hp,Op) bf16  bfc(1,Op) f32
    #   outputs: preds(B,Op) h_out(L,B,Hp) c_out(L,B,Hp) attn(B,1,Sp)
    #   scratch: enc_vmem(B,Sp,Hp bf16), enc_sem (DMA semaphore)
    L, Hp = num_layers, hidden_pad
    emb_ref, h_ref, c_ref, enc_hbm = refs[0:4]
    lw = refs[4:4 + 2 * L]
    wc_ref, bc_ref, wfc_ref, bfc_ref = refs[4 + 2 * L:8 + 2 * L]
    preds_ref, h_out_ref, c_out_ref, attn_ref = refs[8 + 2 * L:12 + 2 * L]
    enc_vmem, enc_sem = refs[12 + 2 * L], refs[13 + 2 * L]

    # Kick off the encoder-outputs HBM->VMEM copy; it overlaps with the whole
    # LSTM stack below and is awaited right before the attention block.
    enc_copy = pltpu.make_async_copy(enc_hbm, enc_vmem, enc_sem)
    enc_copy.start()

    # ---------------- stacked LSTM cells (single time step) ----------------
    x = emb_ref[...]                                     # (B, Ep) f32
    for l in range(L):
        w = lw[2 * l][...]                               # (in_p+Hp, 4Hp) bf16 [Wih;Whh]
        b = lw[2 * l + 1][...]                           # (1, 4Hp)  f32 (b_ih+b_hh)
        h_prev = h_ref[l]                                # (B, Hp)  (aliased: read
        c_prev = c_ref[l]                                #  before the write below)
        xh = jnp.concatenate([x, h_prev], axis=1).astype(jnp.bfloat16)
        gates = jnp.dot(xh, w, preferred_element_type=jnp.float32) + b   # (B, 4Hp)
        # Gate slabs are lane-aligned (Hp % 128 == 0) -> free static views.
        i = jax.nn.sigmoid(gates[:, 0 * Hp:1 * Hp])
        f = jax.nn.sigmoid(gates[:, 1 * Hp:2 * Hp])
        g = jnp.tanh(gates[:, 2 * Hp:3 * Hp])
        o = jax.nn.sigmoid(gates[:, 3 * Hp:4 * Hp])
        c_new = f * c_prev + i * g                       # f32 elementwise (v5e-safe)
        h_new = o * jnp.tanh(c_new)
        h_out_ref[l] = h_new
        c_out_ref[l] = c_new
        x = h_new
    out_top = x                                          # outputs.squeeze(0): (B, Hp)

    # ------------ dot-score attention (batched) + softmax + context ------------
    enc_copy.wait()
    enc = enc_vmem[...]                                  # (B, Sp, Hp) bf16
    q3 = out_top.astype(jnp.bfloat16)[:, None, :]        # (B, 1, Hp)
    s3 = jnp.einsum("bqh,bsh->bqs", q3, enc,
                    preferred_element_type=jnp.float32)  # (B, 1, Sp)
    col = lax.broadcasted_iota(jnp.int32, s3.shape, 2)
    s3 = jnp.where(col < seq_len, s3, jnp.float32(-1e30))  # mask padded positions
    m = jnp.max(s3, axis=2, keepdims=True)
    e = jnp.exp(s3 - m)
    w3 = e / jnp.sum(e, axis=2, keepdims=True)           # exact softmax (sums to 1)
    attn_ref[...] = w3                                   # single lane-dense store
    ctx = jnp.einsum("bqs,bsh->bqh", w3.astype(jnp.bfloat16), enc,
                     preferred_element_type=jnp.float32)[:, 0, :]       # (B, Hp)

    # --------------- concat Linear + tanh + fc + log-softmax ----------------
    oc = jnp.concatenate([out_top, ctx], axis=1).astype(jnp.bfloat16)   # (B, 2Hp)
    hcat = jnp.tanh(jnp.dot(oc, wc_ref[...], preferred_element_type=jnp.float32)
                    + bc_ref[...])                       # (B, Hp)
    logits = (jnp.dot(hcat.astype(jnp.bfloat16), wfc_ref[...],
                      preferred_element_type=jnp.float32)
              + bfc_ref[...])                            # (B, Op); padded cols ~ -1e30
    m2 = jnp.max(logits, axis=1, keepdims=True)
    lse = m2 + jnp.log(jnp.sum(jnp.exp(logits - m2), axis=1, keepdims=True))
    preds_ref[...] = logits - lse                        # log_softmax(dim=1)


def decoder_step(packed, emb, h_pad, c_pad, enc_padded, seq_len):
    L, B, Hp = h_pad.shape
    Sp = enc_padded.shape[1]
    Op = packed["bfc"].shape[1]

    flat_w = []
    for l in range(L):
        flat_w += [packed["lstm_w"][l], packed["lstm_b"][l]]
    flat_w += [packed["wc"], packed["bc"], packed["wfc"], packed["bfc"]]

    vmem = pl.BlockSpec(memory_space=pltpu.MemorySpace.VMEM)
    kernel = functools.partial(_decoder_step_kernel, num_layers=L,
                               hidden_pad=Hp, seq_len=seq_len)
    return pl.pallas_call(
        kernel,
        out_shape=(jax.ShapeDtypeStruct((B, Op), jnp.float32),
                   jax.ShapeDtypeStruct((L, B, Hp), jnp.float32),
                   jax.ShapeDtypeStruct((L, B, Hp), jnp.float32),
                   jax.ShapeDtypeStruct((B, 1, Sp), jnp.float32)),
        in_specs=[vmem, vmem, vmem, pl.BlockSpec(memory_space=pl.ANY)]
                 + [vmem] * len(flat_w),
        out_specs=(vmem, vmem, vmem, vmem),
        scratch_shapes=[pltpu.VMEM((B, Sp, Hp), jnp.bfloat16),
                        pltpu.SemaphoreType.DMA(())],
        input_output_aliases={1: 1, 2: 2},       # hidden/cell updated in place
        compiler_params=pltpu.CompilerParams(vmem_limit_bytes=_vmem_limit_bytes()),
    )(emb, h_pad, c_pad, enc_padded, *flat_w)


# --------------------------------- wrappers ----------------------------------
def prepare_encoder_outputs(encoder_outputs_sbh):
    """Hoisted once per sequence: PyTorch (S,B,H) f32 -> lane-padded bf16 (B,Sp,Hp)."""
    S, B, H = encoder_outputs_sbh.shape
    Sp, Hp = _round_up(S, _LANE), _round_up(H, _LANE)
    enc = jnp.transpose(encoder_outputs_sbh, (1, 0, 2)).astype(jnp.bfloat16)
    return jnp.zeros((B, Sp, Hp), jnp.bfloat16).at[:, :S, :H].set(enc)


@functools.partial(jax.jit, static_argnames=("seq_len", "output_size"))
def decoder_forward(packed, x_tokens, enc_padded, hidden, cell, *, seq_len,
                    output_size):
    """x_tokens (B,) int32; enc_padded (B,Sp,Hp) bf16; hidden/cell (L,B,H) f32."""
    L, B, H = hidden.shape
    Hp = packed["bc"].shape[1]
    # x.unsqueeze(0) + embedding -> (1,B,E); keep (B,E).  dropout: eval -> identity.
    emb = jnp.take(packed["embedding"], x_tokens, axis=0)             # (B, Ep)
    h_pad = jnp.zeros((L, B, Hp), jnp.float32).at[:, :, :H].set(hidden)
    c_pad = jnp.zeros((L, B, Hp), jnp.float32).at[:, :, :H].set(cell)
    preds_p, h_p, c_p, attn_p = decoder_step(packed, emb, h_pad, c_pad,
                                             enc_padded, seq_len)
    # TODO(synk): a real autoregressive loop should carry the padded state and
    # move the timestep loop into the kernel grid so weights stay VMEM-resident.
    return (preds_p[:, :output_size], h_p[:, :, :H], c_p[:, :, :H],
            attn_p[:, 0, :seq_len])


# -------------------------- parameter init / packing -------------------------
def init_decoder_params(key, input_size, embedding_size, hidden_size,
                        output_size, num_layers):
    """Logical (unpadded, PyTorch-layout) weights; matmul weights bf16-representable."""
    keys = jax.random.split(key, 4 + 3 * num_layers)
    s = 0.1

    def bf16_repr(x):                 # kernel stores matmul weights in bf16
        return x.astype(jnp.bfloat16).astype(jnp.float32)

    params = {
        "embedding": s * jax.random.normal(keys[0], (input_size, embedding_size),
                                           jnp.float32),
        "wih_t": [], "whh_t": [], "b": [],
    }
    for l in range(num_layers):
        in_sz = embedding_size if l == 0 else hidden_size
        params["wih_t"].append(bf16_repr(
            s * jax.random.normal(keys[1 + 3 * l], (in_sz, 4 * hidden_size),
                                  jnp.float32)))
        params["whh_t"].append(bf16_repr(
            s * jax.random.normal(keys[2 + 3 * l], (hidden_size, 4 * hidden_size),
                                  jnp.float32)))
        params["b"].append(
            s * jax.random.normal(keys[3 + 3 * l], (1, 4 * hidden_size), jnp.float32))
    kc, kf, kb = keys[-3], keys[-2], keys[-1]
    params["wc_t"] = bf16_repr(
        s * jax.random.normal(kc, (2 * hidden_size, hidden_size), jnp.float32))
    params["bc"] = s * jax.random.normal(kb, (1, hidden_size), jnp.float32)
    params["wfc_t"] = bf16_repr(
        s * jax.random.normal(kf, (hidden_size, output_size), jnp.float32))
    params["bfc"] = jnp.zeros((1, output_size), jnp.float32)
    return params


def pack_decoder_params(params, weight_dtype=jnp.bfloat16, lane=_LANE):
    """Lane-pad and fuse logical weights into the kernel layout."""
    E = params["embedding"].shape[1]
    H = params["bc"].shape[1]
    O = params["bfc"].shape[1]
    L = len(params["wih_t"])
    Ep, Hp, Op = _round_up(E, lane), _round_up(H, lane), _round_up(O, lane)

    def pad_gates(w):                 # (rows, 4H) -> (rows, 4Hp), slab k at k*Hp
        out = jnp.zeros((w.shape[0], 4 * Hp), jnp.float32)
        for k in range(4):
            out = out.at[:, k * Hp:k * Hp + H].set(w[:, k * H:(k + 1) * H])
        return out

    packed = {"lstm_w": [], "lstm_b": []}
    packed["embedding"] = (jnp.zeros((params["embedding"].shape[0], Ep), jnp.float32)
                           .at[:, :E].set(params["embedding"]))
    for l in range(L):
        in_sz = E if l == 0 else H
        in_pad = Ep if l == 0 else Hp
        wih_g = pad_gates(params["wih_t"][l])            # (in_sz, 4Hp)
        whh_g = pad_gates(params["whh_t"][l])            # (H, 4Hp)
        w = (jnp.zeros((in_pad + Hp, 4 * Hp), jnp.float32)
             .at[:in_sz, :].set(wih_g)
             .at[in_pad:in_pad + H, :].set(whh_g))       # fused [Wih; Whh]
        packed["lstm_w"].append(w.astype(weight_dtype))
        packed["lstm_b"].append(pad_gates(params["b"][l]))
    wc = (jnp.zeros((2 * Hp, Hp), jnp.float32)
          .at[:H, :H].set(params["wc_t"][:H, :])         # out_top rows
          .at[Hp:Hp + H, :H].set(params["wc_t"][H:, :])) # ctx rows
    packed["wc"] = wc.astype(weight_dtype)
    packed["bc"] = jnp.zeros((1, Hp), jnp.float32).at[:, :H].set(params["bc"])
    packed["wfc"] = (jnp.zeros((Hp, Op), jnp.float32)
                     .at[:H, :O].set(params["wfc_t"])).astype(weight_dtype)
    # Padded logits get bias -1e30 so they vanish in log-softmax.
    packed["bfc"] = jnp.full((1, Op), -1e30, jnp.float32).at[:, :O].set(params["bfc"])
    return packed


# ---------------------- pure-JAX reference (for checking) --------------------
def decoder_reference(params, x_tokens, encoder_outputs_sbh, hidden, cell):
    x = jnp.take(params["embedding"], x_tokens, axis=0)
    enc = jnp.transpose(encoder_outputs_sbh, (1, 0, 2))
    L, _, H = hidden.shape
    hs, cs = [], []
    for l in range(L):
        gates = (x @ params["wih_t"][l] + hidden[l] @ params["whh_t"][l]
                 + params["b"][l])
        i = jax.nn.sigmoid(gates[:, :H])
        f = jax.nn.sigmoid(gates[:, H:2 * H])
        g = jnp.tanh(gates[:, 2 * H:3 * H])
        o = jax.nn.sigmoid(gates[:, 3 * H:])
        c_new = f * cell[l] + i * g
        h_new = o * jnp.tanh(c_new)
        hs.append(h_new); cs.append(c_new); x = h_new
    out_top = x
    scores = jnp.einsum("bh,bsh->bs", out_top, enc)
    w = jax.nn.softmax(scores, axis=1)
    ctx = jnp.einsum("bs,bsh->bh", w, enc)
    hcat = jnp.tanh(jnp.concatenate([out_top, ctx], axis=1) @ params["wc_t"]
                    + params["bc"])
    logits = hcat @ params["wfc_t"] + params["bfc"]
    return jax.nn.log_softmax(logits, axis=1), jnp.stack(hs), jnp.stack(cs), w


if __name__ == "__main__":
    # Small shapes consistent with the module's forward.
    B, S = 2, 8                          # batch, encoder sequence length
    V, E, H, O, L = 20, 16, 32, 24, 2    # vocab, embed, hidden, output, layers

    key = jax.random.PRNGKey(0)
    kp, kx, ke, kh, kc = jax.random.split(key, 5)

    params = init_decoder_params(kp, V, E, H, O, L)       # logical / PyTorch layout
    packed = pack_decoder_params(params)                  # lane-padded kernel weights

    x_tokens = jax.random.randint(kx, (B,), 0, V, dtype=jnp.int32)
    encoder_outputs = jax.random.normal(ke, (S, B, H), jnp.float32)   # PyTorch (S,B,H)
    hidden = jax.random.normal(kh, (L, B, H), jnp.float32)
    cell = jax.random.normal(kc, (L, B, H), jnp.float32)

    enc_padded = prepare_encoder_outputs(encoder_outputs)  # hoisted once per sequence

    preds, h_new, c_new, attn_w = decoder_forward(packed, x_tokens, enc_padded,
                                                  hidden, cell, seq_len=S,
                                                  output_size=O)
    jax.block_until_ready((preds, h_new, c_new, attn_w))

    assert preds.shape == (B, O)
    assert h_new.shape == (L, B, H) and c_new.shape == (L, B, H)
    assert attn_w.shape == (B, S)
    # exact softmaxes -> tight normalization checks
    assert jnp.allclose(jnp.sum(jnp.exp(preds), axis=1), 1.0, atol=1e-3)
    assert jnp.allclose(jnp.sum(attn_w, axis=1), 1.0, atol=1e-3)

    # Compare against the pure-JAX f32 reference (same bf16-representable
    # weights; the kernel additionally rounds matmul activations and the
    # encoder outputs to bf16 -> loose tolerances).
    p_ref, h_ref_, c_ref_, w_ref_ = decoder_reference(params, x_tokens,
                                                      encoder_outputs, hidden, cell)
    assert jnp.allclose(preds, p_ref, atol=1e-1)
    assert jnp.allclose(h_new, h_ref_, atol=5e-2)
    assert jnp.allclose(c_new, c_ref_, atol=5e-2)
    assert jnp.allclose(attn_w, w_ref_, atol=5e-2)

    print("KERNEL_OK")
</pallas_src>

<mosaic_0001>
module attributes {stable_mosaic.version = 11 : i64} {
  func.func @_decoder_step_kernel(%arg0: memref<2x128xf32, #tpu.memory_space<vmem>>, %arg1: memref<2x2x128xf32, #tpu.memory_space<vmem>>, %arg2: memref<2x2x128xf32, #tpu.memory_space<vmem>>, %arg3: memref<2x128x128xbf16, #tpu.memory_space<any>>, %arg4: memref<256x512xbf16, #tpu.memory_space<vmem>>, %arg5: memref<1x512xf32, #tpu.memory_space<vmem>>, %arg6: memref<256x512xbf16, #tpu.memory_space<vmem>>, %arg7: memref<1x512xf32, #tpu.memory_space<vmem>>, %arg8: memref<256x128xbf16, #tpu.memory_space<vmem>>, %arg9: memref<1x128xf32, #tpu.memory_space<vmem>>, %arg10: memref<128x128xbf16, #tpu.memory_space<vmem>>, %arg11: memref<1x128xf32, #tpu.memory_space<vmem>>, %arg12: memref<2x128xf32, #tpu.memory_space<vmem>>, %arg13: memref<2x2x128xf32, #tpu.memory_space<vmem>>, %arg14: memref<2x2x128xf32, #tpu.memory_space<vmem>>, %arg15: memref<2x1x128xf32, #tpu.memory_space<vmem>>, %arg16: memref<2x128x128xbf16, #tpu.memory_space<vmem>>, %arg17: memref<!tpu.dma_semaphore, #tpu.memory_space<semaphore_mem>>) attributes {dimension_semantics = [], scalar_prefetch = 0 : i64, scratch_operands = 2 : i64, tpu.core_type = #tpu.core_type<tc>} {
    tpu.enqueue_dma source(%arg3 : memref<2x128x128xbf16, #tpu.memory_space<any>>) target(%arg16 : memref<2x128x128xbf16, #tpu.memory_space<vmem>>) target_semaphore(%arg17 : memref<!tpu.dma_semaphore, #tpu.memory_space<semaphore_mem>>)
    %c0 = arith.constant 0 : index
    %c0_0 = arith.constant 0 : index
    %0 = vector.load %arg0[%c0, %c0_0] : memref<2x128xf32, #tpu.memory_space<vmem>>, vector<2x128xf32>
    %c0_1 = arith.constant 0 : index
    %c0_2 = arith.constant 0 : index
    %1 = vector.load %arg4[%c0_1, %c0_2] : memref<256x512xbf16, #tpu.memory_space<vmem>>, vector<256x512xbf16>
    %c0_3 = arith.constant 0 : index
    %c0_4 = arith.constant 0 : index
    %2 = vector.load %arg5[%c0_3, %c0_4] : memref<1x512xf32, #tpu.memory_space<vmem>>, vector<1x512xf32>
    %c0_5 = arith.constant 0 : index
    %c0_6 = arith.constant 0 : index
    %c0_7 = arith.constant 0 : index
    %3 = vector.load %arg1[%c0_5, %c0_6, %c0_7] : memref<2x2x128xf32, #tpu.memory_space<vmem>>, vector<1x2x128xf32>
    %4 = vector.shape_cast %3 : vector<1x2x128xf32> to vector<2x128xf32>
    %c0_8 = arith.constant 0 : index
    %c0_9 = arith.constant 0 : index
    %c0_10 = arith.constant 0 : index
    %5 = vector.load %arg2[%c0_8, %c0_9, %c0_10] : memref<2x2x128xf32, #tpu.memory_space<vmem>>, vector<1x2x128xf32>
    %6 = vector.shape_cast %5 : vector<1x2x128xf32> to vector<2x128xf32>
    %7 = tpu.concatenate %0, %4 in 1 : vector<2x128xf32>, vector<2x128xf32> -> vector<2x256xf32>
    %8 = arith.truncf %7 : vector<2x256xf32> to vector<2x256xbf16>
    %cst = arith.constant dense<0.000000e+00> : vector<2x512xf32>
    %9 = tpu.matmul %8, %1, %cst {dimension_numbers = #tpu.dot_dimension_numbers<[1], [0], [0], [1], [0, 0, 1, 1], [], []>} : vector<2x256xbf16>, vector<256x512xbf16>, vector<2x512xf32> -> vector<2x512xf32>
    %10 = vector.broadcast %2 : vector<1x512xf32> to vector<2x512xf32>
    %11 = arith.addf %9, %10 : vector<2x512xf32>
    %12 = vector.extract_strided_slice %11 {offsets = [0, 0], sizes = [2, 128], strides = [1, 1]} : vector<2x512xf32> to vector<2x128xf32>
    %13 = arith.negf %12 : vector<2x128xf32>
    %14 = math.exp %13 : vector<2x128xf32>
    %cst_11 = arith.constant 1.000000e+00 : f32
    %15 = vector.broadcast %cst_11 : f32 to vector<2x128xf32>
    %16 = arith.addf %15, %14 : vector<2x128xf32>
    %17 = arith.divf %15, %16 : vector<2x128xf32>
    %18 = vector.extract_strided_slice %11 {offsets = [0, 128], sizes = [2, 128], strides = [1, 1]} : vector<2x512xf32> to vector<2x128xf32>
    %19 = arith.negf %18 : vector<2x128xf32>
    %20 = math.exp %19 : vector<2x128xf32>
    %cst_12 = arith.constant 1.000000e+00 : f32
    %21 = vector.broadcast %cst_12 : f32 to vector<2x128xf32>
    %22 = arith.addf %21, %20 : vector<2x128xf32>
    %23 = arith.divf %21, %22 : vector<2x128xf32>
    %24 = vector.extract_strided_slice %11 {offsets = [0, 256], sizes = [2, 128], strides = [1, 1]} : vector<2x512xf32> to vector<2x128xf32>
    %25 = math.tanh %24 : vector<2x128xf32>
    %26 = vector.extract_strided_slice %11 {offsets = [0, 384], sizes = [2, 128], strides = [1, 1]} : vector<2x512xf32> to vector<2x128xf32>
    %27 = arith.negf %26 : vector<2x128xf32>
    %28 = math.exp %27 : vector<2x128xf32>
    %cst_13 = arith.constant 1.000000e+00 : f32
    %29 = vector.broadcast %cst_13 : f32 to vector<2x128xf32>
    %30 = arith.addf %29, %28 : vector<2x128xf32>
    %31 = arith.divf %29, %30 : vector<2x128xf32>
    %32 = arith.mulf %23, %6 : vector<2x128xf32>
    %33 = arith.mulf %17, %25 : vector<2x128xf32>
    %34 = arith.addf %32, %33 : vector<2x128xf32>
    %35 = math.tanh %34 : vector<2x128xf32>
    %36 = arith.mulf %31, %35 : vector<2x128xf32>
    %c0_14 = arith.constant 0 : index
    %c0_15 = arith.constant 0 : index
    %c0_16 = arith.constant 0 : index
    %37 = vector.load %arg13[%c0_14, %c0_15, %c0_16] : memref<2x2x128xf32, #tpu.memory_space<vmem>>, vector<1x2x128xf32>
    %38 = vector.shape_cast %37 : vector<1x2x128xf32> to vector<2x128xf32>
    %39 = vector.shape_cast %36 : vector<2x128xf32> to vector<1x2x128xf32>
    tpu.vector_store %arg13[%c0_14, %c0_15, %c0_16], %39 {strides = array<i32>} : memref<2x2x128xf32, #tpu.memory_space<vmem>>, vector<1x2x128xf32>,
    %c0_17 = arith.constant 0 : index
    %c0_18 = arith.constant 0 : index
    %c0_19 = arith.constant 0 : index
    %40 = vector.load %arg14[%c0_17, %c0_18, %c0_19] : memref<2x2x128xf32, #tpu.memory_space<vmem>>, vector<1x2x128xf32>
    %41 = vector.shape_cast %40 : vector<1x2x128xf32> to vector<2x128xf32>
    %42 = vector.shape_cast %34 : vector<2x128xf32> to vector<1x2x128xf32>
    tpu.vector_store %arg14[%c0_17, %c0_18, %c0_19], %42 {strides = array<i32>} : memref<2x2x128xf32, #tpu.memory_space<vmem>>, vector<1x2x128xf32>,
    %c0_20 = arith.constant 0 : index
    %c0_21 = arith.constant 0 : index
    %43 = vector.load %arg6[%c0_20, %c0_21] : memref<256x512xbf16, #tpu.memory_space<vmem>>, vector<256x512xbf16>
    %c0_22 = arith.constant 0 : index
    %c0_23 = arith.constant 0 : index
    %44 = vector.load %arg7[%c0_22, %c0_23] : memref<1x512xf32, #tpu.memory_space<vmem>>, vector<1x512xf32>
    %c1 = arith.constant 1 : index
    %c0_24 = arith.constant 0 : index
    %c0_25 = arith.constant 0 : index
    %45 = vector.load %arg1[%c1, %c0_24, %c0_25] : memref<2x2x128xf32, #tpu.memory_space<vmem>>, vector<1x2x128xf32>
    %46 = vector.shape_cast %45 : vector<1x2x128xf32> to vector<2x128xf32>
    %c1_26 = arith.constant 1 : index
    %c0_27 = arith.constant 0 : index
    %c0_28 = arith.constant 0 : index
    %47 = vector.load %arg2[%c1_26, %c0_27, %c0_28] : memref<2x2x128xf32, #tpu.memory_space<vmem>>, vector<1x2x128xf32>
    %48 = vector.shape_cast %47 : vector<1x2x128xf32> to vector<2x128xf32>
    %49 = tpu.concatenate %36, %46 in 1 : vector<2x128xf32>, vector<2x128xf32> -> vector<2x256xf32>
    %50 = arith.truncf %49 : vector<2x256xf32> to vector<2x256xbf16>
    %cst_29 = arith.constant dense<0.000000e+00> : vector<2x512xf32>
    %51 = tpu.matmul %50, %43, %cst_29 {dimension_numbers = #tpu.dot_dimension_numbers<[1], [0], [0], [1], [0, 0, 1, 1], [], []>} : vector<2x256xbf16>, vector<256x512xbf16>, vector<2x512xf32> -> vector<2x512xf32>
    %52 = vector.broadcast %44 : vector<1x512xf32> to vector<2x512xf32>
    %53 = arith.addf %51, %52 : vector<2x512xf32>
    %54 = vector.extract_strided_slice %53 {offsets = [0, 0], sizes = [2, 128], strides = [1, 1]} : vector<2x512xf32> to vector<2x128xf32>
    %55 = arith.negf %54 : vector<2x128xf32>
    %56 = math.exp %55 : vector<2x128xf32>
    %cst_30 = arith.constant 1.000000e+00 : f32
    %57 = vector.broadcast %cst_30 : f32 to vector<2x128xf32>
    %58 = arith.addf %57, %56 : vector<2x128xf32>
    %59 = arith.divf %57, %58 : vector<2x128xf32>
    %60 = vector.extract_strided_slice %53 {offsets = [0, 128], sizes = [2, 128], strides = [1, 1]} : vector<2x512xf32> to vector<2x128xf32>
    %61 = arith.negf %60 : vector<2x128xf32>
    %62 = math.exp %61 : vector<2x128xf32>
    %cst_31 = arith.constant 1.000000e+00 : f32
    %63 = vector.broadcast %cst_31 : f32 to vector<2x128xf32>
    %64 = arith.addf %63, %62 : vector<2x128xf32>
    %65 = arith.divf %63, %64 : vector<2x128xf32>
    %66 = vector.extract_strided_slice %53 {offsets = [0, 256], sizes = [2, 128], strides = [1, 1]} : vector<2x512xf32> to vector<2x128xf32>
    %67 = math.tanh %66 : vector<2x128xf32>
    %68 = vector.extract_strided_slice %53 {offsets = [0, 384], sizes = [2, 128], strides = [1, 1]} : vector<2x512xf32> to vector<2x128xf32>
    %69 = arith.negf %68 : vector<2x128xf32>
    %70 = math.exp %69 : vector<2x128xf32>
    %cst_32 = arith.constant 1.000000e+00 : f32
    %71 = vector.broadcast %cst_32 : f32 to vector<2x128xf32>
    %72 = arith.addf %71, %70 : vector<2x128xf32>
    %73 = arith.divf %71, %72 : vector<2x128xf32>
    %74 = arith.mulf %65, %48 : vector<2x128xf32>
    %75 = arith.mulf %59, %67 : vector<2x128xf32>
    %76 = arith.addf %74, %75 : vector<2x128xf32>
    %77 = math.tanh %76 : vector<2x128xf32>
    %78 = arith.mulf %73, %77 : vector<2x128xf32>
    %c1_33 = arith.constant 1 : index
    %c0_34 = arith.constant 0 : index
    %c0_35 = arith.constant 0 : index
    %79 = vector.load %arg13[%c1_33, %c0_34, %c0_35] : memref<2x2x128xf32, #tpu.memory_space<vmem>>, vector<1x2x128xf32>
    %80 = vector.shape_cast %79 : vector<1x2x128xf32> to vector<2x128xf32>
    %81 = vector.shape_cast %78 : vector<2x128xf32> to vector<1x2x128xf32>
    tpu.vector_store %arg13[%c1_33, %c0_34, %c0_35], %81 {strides = array<i32>} : memref<2x2x128xf32, #tpu.memory_space<vmem>>, vector<1x2x128xf32>,
    %c1_36 = arith.constant 1 : index
    %c0_37 = arith.constant 0 : index
    %c0_38 = arith.constant 0 : index
    %82 = vector.load %arg14[%c1_36, %c0_37, %c0_38] : memref<2x2x128xf32, #tpu.memory_space<vmem>>, vector<1x2x128xf32>
    %83 = vector.shape_cast %82 : vector<1x2x128xf32> to vector<2x128xf32>
    %84 = vector.shape_cast %76 : vector<2x128xf32> to vector<1x2x128xf32>
    tpu.vector_store %arg14[%c1_36, %c0_37, %c0_38], %84 {strides = array<i32>} : memref<2x2x128xf32, #tpu.memory_space<vmem>>, vector<1x2x128xf32>,
    tpu.wait_dma2 semaphore(%arg17 : memref<!tpu.dma_semaphore, #tpu.memory_space<semaphore_mem>>) src(%arg3 : memref<2x128x128xbf16, #tpu.memory_space<any>>) dst(%arg16 : memref<2x128x128xbf16, #tpu.memory_space<vmem>>)
    %c0_39 = arith.constant 0 : index
    %c0_40 = arith.constant 0 : index
    %c0_41 = arith.constant 0 : index
    %85 = vector.load %arg16[%c0_39, %c0_40, %c0_41] : memref<2x128x128xbf16, #tpu.memory_space<vmem>>, vector<2x128x128xbf16>
    %86 = arith.truncf %78 : vector<2x128xf32> to vector<2x128xbf16>
    %87 = vector.shape_cast %86 : vector<2x128xbf16> to vector<2x1x128xbf16>
    "tpu.trace_start"() <{level = 10 : i32, message = "bqh,bsh->bqs"}> : () -> ()
    %cst_42 = arith.constant dense<0.000000e+00> : vector<2x1x128xf32>
    %88 = tpu.matmul %87, %85, %cst_42 {dimension_numbers = #tpu.dot_dimension_numbers<[2], [2], [1], [1], [0, 0, 0, 1, 1, 1], [0], [0]>} : vector<2x1x128xbf16>, vector<2x128x128xbf16>, vector<2x1x128xf32> -> vector<2x1x128xf32>
    "tpu.trace_stop"() : () -> ()
    %89 = tpu.iota {dimensions = array<i32: 2>} : vector<2x1x128xi32>
    %c8_i32 = arith.constant 8 : i32
    %90 = vector.broadcast %c8_i32 : i32 to vector<2x1x128xi32>
    %91 = arith.cmpi slt, %89, %90 : vector<2x1x128xi32>
    %cst_43 = arith.constant -1.000000e+30 : f32
    %92 = vector.broadcast %cst_43 : f32 to vector<2x1x128xf32>
    %93 = arith.select %91, %88, %92 : vector<2x1x128xi1>, vector<2x1x128xf32>
    %cst_44 = arith.constant dense<0xFF800000> : vector<2x1xf32>
    %94 = vector.multi_reduction <maximumf>, %93, %cst_44 [2] : vector<2x1x128xf32> to vector<2x1xf32>
    %95 = vector.shape_cast %94 : vector<2x1xf32> to vector<2x1x1xf32>
    %96 = vector.broadcast %95 : vector<2x1x1xf32> to vector<2x1x128xf32>
    %97 = arith.subf %93, %96 : vector<2x1x128xf32>
    %98 = math.exp %97 : vector<2x1x128xf32>
    %cst_45 = arith.constant dense<0.000000e+00> : vector<2x1xf32>
    %99 = vector.multi_reduction <add>, %98, %cst_45 [2] : vector<2x1x128xf32> to vector<2x1xf32>
    %100 = vector.shape_cast %99 : vector<2x1xf32> to vector<2x1x1xf32>
    %101 = vector.broadcast %100 : vector<2x1x1xf32> to vector<2x1x128xf32>
    %102 = arith.divf %98, %101 : vector<2x1x128xf32>
    %c0_46 = arith.constant 0 : index
    %c0_47 = arith.constant 0 : index
    %c0_48 = arith.constant 0 : index
    %103 = vector.load %arg15[%c0_46, %c0_47, %c0_48] : memref<2x1x128xf32, #tpu.memory_space<vmem>>, vector<2x1x128xf32>
    tpu.vector_store %arg15[%c0_46, %c0_47, %c0_48], %102 {strides = array<i32>} : memref<2x1x128xf32, #tpu.memory_space<vmem>>, vector<2x1x128xf32>,
    %104 = arith.truncf %102 : vector<2x1x128xf32> to vector<2x1x128xbf16>
    "tpu.trace_start"() <{level = 10 : i32, message = "bqs,bsh->bqh"}> : () -> ()
    %cst_49 = arith.constant dense<0.000000e+00> : vector<2x1x128xf32>
    %105 = tpu.matmul %104, %85, %cst_49 {dimension_numbers = #tpu.dot_dimension_numbers<[2], [1], [1], [2], [0, 0, 0, 1, 1, 2], [0], [0]>} : vector<2x1x128xbf16>, vector<2x128x128xbf16>, vector<2x1x128xf32> -> vector<2x1x128xf32>
    "tpu.trace_stop"() : () -> ()
    %106 = vector.shape_cast %105 : vector<2x1x128xf32> to vector<2x128xf32>
    %107 = tpu.concatenate %78, %106 in 1 : vector<2x128xf32>, vector<2x128xf32> -> vector<2x256xf32>
    %108 = arith.truncf %107 : vector<2x256xf32> to vector<2x256xbf16>
    %c0_50 = arith.constant 0 : index
    %c0_51 = arith.constant 0 : index
    %109 = vector.load %arg8[%c0_50, %c0_51] : memref<256x128xbf16, #tpu.memory_space<vmem>>, vector<256x128xbf16>
    %cst_52 = arith.constant dense<0.000000e+00> : vector<2x128xf32>
    %110 = tpu.matmul %108, %109, %cst_52 {dimension_numbers = #tpu.dot_dimension_numbers<[1], [0], [0], [1], [0, 0, 1, 1], [], []>} : vector<2x256xbf16>, vector<256x128xbf16>, vector<2x128xf32> -> vector<2x128xf32>
    %c0_53 = arith.constant 0 : index
    %c0_54 = arith.constant 0 : index
    %111 = vector.load %arg9[%c0_53, %c0_54] : memref<1x128xf32, #tpu.memory_space<vmem>>, vector<1x128xf32>
    %112 = vector.broadcast %111 : vector<1x128xf32> to vector<2x128xf32>
    %113 = arith.addf %110, %112 : vector<2x128xf32>
    %114 = math.tanh %113 : vector<2x128xf32>
    %115 = arith.truncf %114 : vector<2x128xf32> to vector<2x128xbf16>
    %c0_55 = arith.constant 0 : index
    %c0_56 = arith.constant 0 : index
    %116 = vector.load %arg10[%c0_55, %c0_56] : memref<128x128xbf16, #tpu.memory_space<vmem>>, vector<128x128xbf16>
    %cst_57 = arith.constant dense<0.000000e+00> : vector<2x128xf32>
    %117 = tpu.matmul %115, %116, %cst_57 {dimension_numbers = #tpu.dot_dimension_numbers<[1], [0], [0], [1], [0, 0, 1, 1], [], []>} : vector<2x128xbf16>, vector<128x128xbf16>, vector<2x128xf32> -> vector<2x128xf32>
    %c0_58 = arith.constant 0 : index
    %c0_59 = arith.constant 0 : index
    %118 = vector.load %arg11[%c0_58, %c0_59] : memref<1x128xf32, #tpu.memory_space<vmem>>, vector<1x128xf32>
    %119 = vector.broadcast %118 : vector<1x128xf32> to vector<2x128xf32>
    %120 = arith.addf %117, %119 : vector<2x128xf32>
    %cst_60 = arith.constant dense<0xFF800000> : vector<2xf32>
    %121 = vector.multi_reduction <maximumf>, %120, %cst_60 [1] : vector<2x128xf32> to vector<2xf32>
    %122 = vector.shape_cast %121 : vector<2xf32> to vector<2x1xf32>
    %123 = vector.broadcast %122 : vector<2x1xf32> to vector<2x128xf32>
    %124 = arith.subf %120, %123 : vector<2x128xf32>
    %125 = math.exp %124 : vector<2x128xf32>
    %cst_61 = arith.constant dense<0.000000e+00> : vector<2xf32>
    %126 = vector.multi_reduction <add>, %125, %cst_61 [1] : vector<2x128xf32> to vector<2xf32>
    %127 = vector.shape_cast %126 : vector<2xf32> to vector<2x1xf32>
    %128 = math.log %127 : vector<2x1xf32>
    %129 = arith.addf %122, %128 : vector<2x1xf32>
    %130 = vector.broadcast %129 : vector<2x1xf32> to vector<2x128xf32>
    %131 = arith.subf %120, %130 : vector<2x128xf32>
    %c0_62 = arith.constant 0 : index
    %c0_63 = arith.constant 0 : index
    %132 = vector.load %arg12[%c0_62, %c0_63] : memref<2x128xf32, #tpu.memory_space<vmem>>, vector<2x128xf32>
    tpu.vector_store %arg12[%c0_62, %c0_63], %131 {strides = array<i32>} : memref<2x128xf32, #tpu.memory_space<vmem>>, vector<2x128xf32>,
    return
  }
}

</mosaic_0001>

<llo_original>
// kernel: decoder_forward.1
$region0: #{decoder_forward.1}
  #allocation0 [shape = 'u32[]', space=smem, size = 0x4, offset = 0x4, fixed_abs, tag = 'smem constant byte address 0x4 - core index']
  #allocation1 [shape = 'u32[144,128]{1,0:T(1,128)}', space=vmem, size = 0x12000, scoped, tag = 'internal scratch']
  #allocation2 [shape = 'bf16[2,128,128]{2,1,0:T(8,128)(2,1)}', space=vmem, size = 0x10000, scoped, tag = 'scratch operand']
  #allocation3 [shape = 's32[1]{0}', space=sflag, size = 0x4, scoped, tag = 'scratch operand']
  #allocation19 [shape = 's32[]', space=sflag, size = 0x4, offset = 0, fixed_abs, tag = 'sflag constant byte address 0x0 - dummy sync flag']
  #allocation20 [shape = 's32[]', space=sflag, size = 0x4, offset = 0, fixed_abs, tag = 'sflag constant byte address 0x0 - dummy sync flag']
  #allocation21 [shape = 'u32[]', space=smem, size = 0x4, offset = 0x44, fixed_abs, tag = 'smem constant byte address 0x44 - assertion arg 0']
  #allocation22 [shape = 'u32[]', space=smem, size = 0x4, offset = 0x48, fixed_abs, tag = 'smem constant byte address 0x48 - assertion arg 1']
  %s0 = inlined_call_operand.vmem [shape: f32[2,128], index: 0, kind: input, shape index: {}]
  %s1 = inlined_call_operand.vmem [shape: f32[2,2,128], index: 1, kind: input, shape index: {}, may-alias: {1,13}]
  %s2 = inlined_call_operand.vmem [shape: f32[2,2,128], index: 2, kind: input, shape index: {}, may-alias: {2,14}]
  %s3 = inlined_call_operand.hbm [shape: bf16[2,128,128], index: 3, kind: input, shape index: {}]
  %s4 = inlined_call_operand.hbm [shape: bf16[256,512], index: 4, kind: input, shape index: {}]
  %s5 = inlined_call_operand.hbm [shape: f32[1,512], index: 5, kind: input, shape index: {}]
  %s6 = inlined_call_operand.hbm [shape: bf16[256,512], index: 6, kind: input, shape index: {}]
  %s7 = inlined_call_operand.hbm [shape: f32[1,512], index: 7, kind: input, shape index: {}]
  %s8 = inlined_call_operand.hbm [shape: bf16[256,128], index: 8, kind: input, shape index: {}]
  %s9 = inlined_call_operand.hbm [shape: f32[1,128], index: 9, kind: input, shape index: {}]
  %s10 = inlined_call_operand.vmem [shape: bf16[128,128], index: 10, kind: input, shape index: {}]
  %s11 = inlined_call_operand.hbm [shape: f32[1,128], index: 11, kind: input, shape index: {}]
  %s12 = inlined_call_operand.hbm [shape: f32[2,128], index: 12, kind: output, shape index: {0}]
  %s13 = inlined_call_operand.vmem [shape: f32[2,2,128], index: 13, kind: output, shape index: {1}, may-alias: {1,13}]
  %s14 = inlined_call_operand.vmem [shape: f32[2,2,128], index: 14, kind: output, shape index: {2}, may-alias: {2,14}]
  %s15 = inlined_call_operand.hbm [shape: f32[2,1,128], index: 15, kind: output, shape index: {3}]
  %16 = xla_tuple %s12, %s13, %s14, %s15
  %s17 = sld [smem:[#allocation0]]
  $region110: #{decoder_forward.1} parent=0
    _
  %s19 = ssub.s32 1, %s17
  %s20 = scalar_select 0, %s19, %s17
  $region1: #{decoder_forward.1} parent=0
    #allocation4 [shape = 'u8[262144]{0}', space=vmem, size = 0x40000, scoped, tag = 'input window, operand 4, single buffered']
    #allocation5 [shape = 's32[1]{0}', space=sflag, size = 0x4, scoped, tag = 'scoped memory for decoder_forward.1']
    #allocation6 [shape = 's32[1]{0}', space=sflag, size = 0x4, scoped, tag = 'scoped memory for decoder_forward.1']
    #allocation7 [shape = 'u8[2048]{0}', space=vmem, size = 0x800, scoped, tag = 'input window, operand 5, single buffered']
    #allocation8 [shape = 's32[1]{0}', space=sflag, size = 0x4, scoped, tag = 'scoped memory for decoder_forward.1']
    #allocation9 [shape = 'u8[262144]{0}', space=vmem, size = 0x40000, scoped, tag = 'input window, operand 6, single buffered']
    #allocation10 [shape = 'u8[2048]{0}', space=vmem, size = 0x800, scoped, tag = 'input window, operand 7, single buffered']
    #allocation11 [shape = 's32[1]{0}', space=sflag, size = 0x4, scoped, tag = 'scoped memory for decoder_forward.1']
    #allocation12 [shape = 'u8[65536]{0}', space=vmem, size = 0x10000, scoped, tag = 'input window, operand 8, single buffered']
    #allocation13 [shape = 'u8[512]{0}', space=vmem, size = 0x400, scoped, tag = 'input window, operand 9, single buffered']
    #allocation14 [shape = 's32[1]{0}', space=sflag, size = 0x4, scoped, tag = 'scoped memory for decoder_forward.1']
    #allocation15 [shape = 'u8[512]{0}', space=vmem, size = 0x400, scoped, tag = 'input window, operand 11, single buffered']
    #allocation16 [shape = 'u8[1024]{0}', space=vmem, size = 0x400, scoped, tag = 'output window, operand 0, single buffered']
    #allocation17 [shape = 'u8[1024]{0}', space=vmem, size = 0x400, scoped, tag = 'output window, operand 3, single buffered']
    #allocation18 [shape = 's32[1]{0}', space=sflag, size = 0x4, scoped, tag = 'scoped memory for decoder_forward.1']
    %21 = vsyncpa [#allocation5], 0
    %22 = vsyncpa [#allocation8], 0
    %23 = vsyncpa [#allocation11], 0
    %24 = vsyncpa [#allocation14], 0
    %25 = vsyncpa [#allocation6], 0
    %26 = vsyncpa [#allocation18], 0
    // Predicated region
    $region2: #{decoder_forward.1} parent=1 // pred_check
      _
    $region3: #{decoder_forward.1} parent=1 // pred_check_branch
      %28 = sbr.rel (0) target = $region5
    $region4: #{decoder_forward.1} parent=1 // pred_region
      _
    $region5: #{decoder_forward.1} parent=1 // pred_fallthru
      _
    // Predicated region
    $region6: #{decoder_forward.1} parent=1 // pred_check
      _
    $region7: #{decoder_forward.1} parent=1 // pred_check_branch
      %30 = sbr.rel (0) target = $region9
    $region8: #{decoder_forward.1} parent=1 // pred_region
      _
    $region9: #{decoder_forward.1} parent=1 // pred_fallthru
      _
    // Predicated region
    $region10: #{decoder_forward.1} parent=1 // pred_check
      _
    $region11: #{decoder_forward.1} parent=1 // pred_check_branch
      %32 = sbr.rel (0) target = $region13
    $region12: #{decoder_forward.1} parent=1 // pred_region
      _
    $region13: #{decoder_forward.1} parent=1 // pred_fallthru
      _
    // Predicated region
    $region14: #{decoder_forward.1} parent=1 // pred_check
      _
    $region15: #{decoder_forward.1} parent=1 // pred_check_branch
      %34 = sbr.rel (0) target = $region17
    $region16: #{decoder_forward.1} parent=1 // pred_region
      %s36 = ssub.s32 8192, 8192
      %37 = vsyncadd [#allocation5], %s36
      %s38 = sshll.u32 [#allocation4], 4
      %s39 = int_to_ptr.vmem [resolvable:$true] %s38
      %44 = dma.hbm_to_vmem [thread:$0]  %s4, 8192, %s39, [#allocation5], 256, 256, 16
    $region17: #{decoder_forward.1} parent=1 // pred_fallthru
      _
    // Predicated region
    $region18: #{decoder_forward.1} parent=1 // pred_check
      _
    $region19: #{decoder_forward.1} parent=1 // pred_check_branch
      %46 = sbr.rel (0) target = $region21
    $region20: #{decoder_forward.1} parent=1 // pred_region
      %s48 = ssub.s32 64, 64
      %49 = vsyncadd [#allocation8], %s48
      %s51 = sshll.u32 [#allocation7], 4
      %s52 = int_to_ptr.vmem [resolvable:$true] %s51
      %54 = dma.hbm_to_vmem [thread:$0]  %s5, 64, %s52, [#allocation8]
    $region21: #{decoder_forward.1} parent=1 // pred_fallthru
      _
    // Predicated region
    $region22: #{decoder_forward.1} parent=1 // pred_check
      _
    $region23: #{decoder_forward.1} parent=1 // pred_check_branch
      %56 = sbr.rel (0) target = $region25
    $region24: #{decoder_forward.1} parent=1 // pred_region
      %s58 = ssub.s32 8192, 8192
      %59 = vsyncadd [#allocation8], %s58
      %s60 = sshll.u32 [#allocation9], 4
      %s61 = int_to_ptr.vmem [resolvable:$true] %s60
      %66 = dma.hbm_to_vmem [thread:$0]  %s6, 8192, %s61, [#allocation8], 256, 256, 16
    $region25: #{decoder_forward.1} parent=1 // pred_fallthru
      _
    // Predicated region
    $region26: #{decoder_forward.1} parent=1 // pred_check
      _
    $region27: #{decoder_forward.1} parent=1 // pred_check_branch
      %68 = sbr.rel (0) target = $region29
    $region28: #{decoder_forward.1} parent=1 // pred_region
      %s70 = ssub.s32 64, 64
      %71 = vsyncadd [#allocation11], %s70
      %s73 = sshll.u32 [#allocation10], 4
      %s74 = int_to_ptr.vmem [resolvable:$true] %s73
      %76 = dma.hbm_to_vmem [thread:$0]  %s7, 64, %s74, [#allocation11]
    $region29: #{decoder_forward.1} parent=1 // pred_fallthru
      _
    // Predicated region
    $region30: #{decoder_forward.1} parent=1 // pred_check
      _
    $region31: #{decoder_forward.1} parent=1 // pred_check_branch
      %78 = sbr.rel (0) target = $region33
    $region32: #{decoder_forward.1} parent=1 // pred_region
      %s80 = ssub.s32 2048, 2048
      %81 = vsyncadd [#allocation11], %s80
      %s82 = sshll.u32 [#allocation12], 4
      %s83 = int_to_ptr.vmem [resolvable:$true] %s82
      %88 = dma.hbm_to_vmem [thread:$0]  %s8, 2048, %s83, [#allocation11], 64, 64, 4
    $region33: #{decoder_forward.1} parent=1 // pred_fallthru
      _
    // Predicated region
    $region34: #{decoder_forward.1} parent=1 // pred_check
      _
    $region35: #{decoder_forward.1} parent=1 // pred_check_branch
      %90 = sbr.rel (0) target = $region37
    $region36: #{decoder_forward.1} parent=1 // pred_region
      %s92 = ssub.s32 16, 16
      %93 = vsyncadd [#allocation14], %s92
      %s95 = sshll.u32 [#allocation13], 4
      %s96 = int_to_ptr.vmem [resolvable:$true] %s95
      %98 = dma.hbm_to_vmem [thread:$0]  %s9, 16, %s96, [#allocation14]
    $region37: #{decoder_forward.1} parent=1 // pred_fallthru
      _
    // Predicated region
    $region38: #{decoder_forward.1} parent=1 // pred_check
      _
    $region39: #{decoder_forward.1} parent=1 // pred_check_branch
      %100 = sbr.rel (0) target = $region41
    $region40: #{decoder_forward.1} parent=1 // pred_region
      _
    $region41: #{decoder_forward.1} parent=1 // pred_fallthru
      _
    // Predicated region
    $region42: #{decoder_forward.1} parent=1 // pred_check
      _
    $region43: #{decoder_forward.1} parent=1 // pred_check_branch
      %102 = sbr.rel (0) target = $region45
    $region44: #{decoder_forward.1} parent=1 // pred_region
      %s104 = ssub.s32 16, 16
      %105 = vsyncadd [#allocation14], %s104
      %s107 = sshll.u32 [#allocation15], 4
      %s108 = int_to_ptr.vmem [resolvable:$true] %s107
      %110 = dma.hbm_to_vmem [thread:$0]  %s11, 16, %s108, [#allocation14]
    $region45: #{decoder_forward.1} parent=1 // pred_fallthru
      _
    // Predicated region
    $region46: #{decoder_forward.1} parent=1 // pred_check
      _
    $region47: #{decoder_forward.1} parent=1 // pred_check_branch
      %112 = sbr.rel (0) target = $region49
    $region48: #{decoder_forward.1} parent=1 // pred_region
      %113 = dma.done [#allocation5], 8192
    $region49: #{decoder_forward.1} parent=1 // pred_fallthru
      _
    // Predicated region
    $region50: #{decoder_forward.1} parent=1 // pred_check
      _
    $region51: #{decoder_forward.1} parent=1 // pred_check_branch
      %115 = sbr.rel (0) target = $region53
    $region52: #{decoder_forward.1} parent=1 // pred_region
      %116 = dma.done [#allocation8], 64
    $region53: #{decoder_forward.1} parent=1 // pred_fallthru
      _
    // Predicated region
    $region54: #{decoder_forward.1} parent=1 // pred_check
      _
    $region55: #{decoder_forward.1} parent=1 // pred_check_branch
      %118 = sbr.rel (0) target = $region57
    $region56: #{decoder_forward.1} parent=1 // pred_region
      %119 = dma.done [#allocation8], 8192
    $region57: #{decoder_forward.1} parent=1 // pred_fallthru
      _
    // Predicated region
    $region58: #{decoder_forward.1} parent=1 // pred_check
      _
    $region59: #{decoder_forward.1} parent=1 // pred_check_branch
      %121 = sbr.rel (0) target = $region61
    $region60: #{decoder_forward.1} parent=1 // pred_region
      %122 = dma.done [#allocation11], 64
    $region61: #{decoder_forward.1} parent=1 // pred_fallthru
      _
    // Predicated region
    $region62: #{decoder_forward.1} parent=1 // pred_check
      _
    $region63: #{decoder_forward.1} parent=1 // pred_check_branch
      %124 = sbr.rel (0) target = $region65
    $region64: #{decoder_forward.1} parent=1 // pred_region
      %125 = dma.done [#allocation11], 2048
    $region65: #{decoder_forward.1} parent=1 // pred_fallthru
      _
    // Predicated region
    $region66: #{decoder_forward.1} parent=1 // pred_check
      _
    $region67: #{decoder_forward.1} parent=1 // pred_check_branch
      %127 = sbr.rel (0) target = $region69
    $region68: #{decoder_forward.1} parent=1 // pred_region
      %128 = dma.done [#allocation14], 16
    $region69: #{decoder_forward.1} parent=1 // pred_fallthru
      _
    // Predicated region
    $region70: #{decoder_forward.1} parent=1 // pred_check
      _
    $region71: #{decoder_forward.1} parent=1 // pred_check_branch
      %130 = sbr.rel (0) target = $region73
    $region72: #{decoder_forward.1} parent=1 // pred_region
      %131 = dma.done [#allocation14], 16
    $region73: #{decoder_forward.1} parent=1 // pred_fallthru
      _
    // Predicated region
    $region74: #{decoder_forward.1} parent=1 // pred_check
      _
    $region75: #{decoder_forward.1} parent=1 // pred_check_branch
      %134 = sbr.rel target = $region77
    $region76: #{decoder_forward.1} parent=1 // pred_region
      %135 = sst [smem:[#allocation21]] [#allocation20]
      %136 = sst [smem:[#allocation22]] [#allocation19]
    $region77: #{decoder_forward.1} parent=1 // pred_fallthru
      _
    %138 = shalt.err (0)
    %s140 = sshll.u32 [#allocation2], 4
    %s141 = int_to_ptr.vmem [resolvable:$true] %s140
    %143 = dma.hbm_to_vmem [thread:$0]  %s3, 2048, %s141, [#allocation3]
    %v144 = vld [vmem:[%s0] sm:$0x3]
    %v145 = vld [vmem:[#allocation4] sm:$0xff]
    %v146 = vld [vmem:[#allocation4 + $0x8] sm:$0xff]
    %v147 = vld [vmem:[#allocation4 + $0x10] sm:$0xff]
    %v148 = vld [vmem:[#allocation4 + $0x18] sm:$0xff]
    %v149 = vld [vmem:[#allocation4 + $0x20] sm:$0xff]
    %v150 = vld [vmem:[#allocation4 + $0x28] sm:$0xff]
    %v151 = vld [vmem:[#allocation4 + $0x30] sm:$0xff]
    %v152 = vld [vmem:[#allocation4 + $0x38] sm:$0xff]
    %v153 = vld [vmem:[#allocation4 + $0x40] sm:$0xff]
    %v154 = vld [vmem:[#allocation4 + $0x48] sm:$0xff]
    %v155 = vld [vmem:[#allocation4 + $0x50] sm:$0xff]
    %v156 = vld [vmem:[#allocation4 + $0x58] sm:$0xff]
    %v157 = vld [vmem:[#allocation4 + $0x60] sm:$0xff]
    %v158 = vld [vmem:[#allocation4 + $0x68] sm:$0xff]
    %v159 = vld [vmem:[#allocation4 + $0x70] sm:$0xff]
    %v160 = vld [vmem:[#allocation4 + $0x78] sm:$0xff]
    %v161 = vld [vmem:[#allocation4 + $0x80] sm:$0xff]
    %v162 = vld [vmem:[#allocation4 + $0x88] sm:$0xff]
    %v163 = vld [vmem:[#allocation4 + $0x90] sm:$0xff]
    %v164 = vld [vmem:[#allocation4 + $0x98] sm:$0xff]
    %v165 = vld [vmem:[#allocation4 + $0xa0] sm:$0xff]
    %v166 = vld [vmem:[#allocation4 + $0xa8] sm:$0xff]
    %v167 = vld [vmem:[#allocation4 + $0xb0] sm:$0xff]
    %v168 = vld [vmem:[#allocation4 + $0xb8] sm:$0xff]
    %v169 = vld [vmem:[#allocation4 + $0xc0] sm:$0xff]
    %v170 = vld [vmem:[#allocation4 + $0xc8] sm:$0xff]
    %v171 = vld [vmem:[#allocation4 + $0xd0] sm:$0xff]
    %v172 = vld [vmem:[#allocation4 + $0xd8] sm:$0xff]
    %v173 = vld [vmem:[#allocation4 + $0xe0] sm:$0xff]
    %v174 = vld [vmem:[#allocation4 + $0xe8] sm:$0xff]
    %v175 = vld [vmem:[#allocation4 + $0xf0] sm:$0xff]
    %v176 = vld [vmem:[#allocation4 + $0xf8] sm:$0xff]
    %v177 = vld [vmem:[#allocation4 + $0x100] sm:$0xff]
    %v178 = vld [vmem:[#allocation4 + $0x108] sm:$0xff]
    %v179 = vld [vmem:[#allocation4 + $0x110] sm:$0xff]
    %v180 = vld [vmem:[#allocation4 + $0x118] sm:$0xff]
    %v181 = vld [vmem:[#allocation4 + $0x120] sm:$0xff]
    %v182 = vld [vmem:[#allocation4 + $0x128] sm:$0xff]
    %v183 = vld [vmem:[#allocation4 + $0x130] sm:$0xff]
    %v184 = vld [vmem:[#allocation4 + $0x138] sm:$0xff]
    %v185 = vld [vmem:[#allocation4 + $0x140] sm:$0xff]
    %v186 = vld [vmem:[#allocation4 + $0x148] sm:$0xff]
    %v187 = vld [vmem:[#allocation4 + $0x150] sm:$0xff]
    %v188 = vld [vmem:[#allocation4 + $0x158] sm:$0xff]
    %v189 = vld [vmem:[#allocation4 + $0x160] sm:$0xff]
    %v190 = vld [vmem:[#allocation4 + $0x168] sm:$0xff]
    %v191 = vld [vmem:[#allocation4 + $0x170] sm:$0xff]
    %v192 = vld [vmem:[#allocation4 + $0x178] sm:$0xff]
    %v193 = vld [vmem:[#allocation4 + $0x180] sm:$0xff]
    %v194 = vld [vmem:[#allocation4 + $0x188] sm:$0xff]
    %v195 = vld [vmem:[#allocation4 + $0x190] sm:$0xff]
    %v196 = vld [vmem:[#allocation4 + $0x198] sm:$0xff]
    %v197 = vld [vmem:[#allocation4 + $0x1a0] sm:$0xff]
    %v198 = vld [vmem:[#allocation4 + $0x1a8] sm:$0xff]
    %v199 = vld [vmem:[#allocation4 + $0x1b0] sm:$0xff]
    %v200 = vld [vmem:[#allocation4 + $0x1b8] sm:$0xff]
    %v201 = vld [vmem:[#allocation4 + $0x1c0] sm:$0xff]
    %v202 = vld [vmem:[#allocation4 + $0x1c8] sm:$0xff]
    %v203 = vld [vmem:[#allocation4 + $0x1d0] sm:$0xff]
    %v204 = vld [vmem:[#allocation4 + $0x1d8] sm:$0xff]
    %v205 = vld [vmem:[#allocation4 + $0x1e0] sm:$0xff]
    %v206 = vld [vmem:[#allocation4 + $0x1e8] sm:$0xff]
    %v207 = vld [vmem:[#allocation4 + $0x1f0] sm:$0xff]
    %v208 = vld [vmem:[#allocation4 + $0x1f8] sm:$0xff]
    %v209 = vld [vmem:[#allocation7] sm:$0xf]
    %v210 = vld [vmem:[%s1] sm:$0x3]
    %v211 = vld [vmem:[%s2] sm:$0x3]
    %v212 = vpack.c.bf16 %v144, %v144
    %v213 = vpack.c.bf16 %v210, %v210
    %v215 = vlaneseq
    %v216 = vshrl.u32 %v215, 7
    %v217 = vsub.s32 0, %v216
    %v218 = vrot.slane %v209, %v217
    %v219 = vlaneseq
    %v220 = vshrl.u32 %v219, 7
    %v221 = vsub.s32 1, %v220
    %v222 = vrot.slane %v209, %v221
    %v223 = vlaneseq
    %v224 = vshrl.u32 %v223, 7
    %v225 = vsub.s32 2, %v224
    %v226 = vrot.slane %v209, %v225
    %v227 = vlaneseq
    %v228 = vshrl.u32 %v227, 7
    %v229 = vsub.s32 3, %v228
    %v230 = vrot.slane %v209, %v229
    %v299 = vunpack.c.l.b16 %v145
    %v300 = vunpack.c.h.b16 %v145
    %v301 = vunpack.c.l.b16 %v146
    %v302 = vunpack.c.h.b16 %v146
    %v303 = vunpack.c.l.b16 %v147
    %v304 = vunpack.c.h.b16 %v147
    %v305 = vunpack.c.l.b16 %v148
    %v306 = vunpack.c.h.b16 %v148
    %v307 = vunpack.c.l.b16 %v149
    %v308 = vunpack.c.h.b16 %v149
    %v309 = vunpack.c.l.b16 %v150
    %v310 = vunpack.c.h.b16 %v150
    %v311 = vunpack.c.l.b16 %v151
    %v312 = vunpack.c.h.b16 %v151
    %v313 = vunpack.c.l.b16 %v152
    %v314 = vunpack.c.h.b16 %v152
    %v315 = vunpack.c.l.b16 %v153
    %v316 = vunpack.c.h.b16 %v153
    %v317 = vunpack.c.l.b16 %v154
    %v318 = vunpack.c.h.b16 %v154
    %v319 = vunpack.c.l.b16 %v155
    %v320 = vunpack.c.h.b16 %v155
    %v321 = vunpack.c.l.b16 %v156
    %v322 = vunpack.c.h.b16 %v156
    %v323 = vunpack.c.l.b16 %v157
    %v324 = vunpack.c.h.b16 %v157
    %v325 = vunpack.c.l.b16 %v158
    %v326 = vunpack.c.h.b16 %v158
    %v327 = vunpack.c.l.b16 %v159
    %v328 = vunpack.c.h.b16 %v159
    %v329 = vunpack.c.l.b16 %v160
    %v330 = vunpack.c.h.b16 %v160
    %v331 = vunpack.c.l.b16 %v161
    %v332 = vunpack.c.h.b16 %v161
    %v333 = vunpack.c.l.b16 %v162
    %v334 = vunpack.c.h.b16 %v162
    %v335 = vunpack.c.l.b16 %v163
    %v336 = vunpack.c.h.b16 %v163
    %v337 = vunpack.c.l.b16 %v164
    %v338 = vunpack.c.h.b16 %v164
    %v339 = vunpack.c.l.b16 %v165
    %v340 = vunpack.c.h.b16 %v165
    %v341 = vunpack.c.l.b16 %v166
    %v342 = vunpack.c.h.b16 %v166
    %v343 = vunpack.c.l.b16 %v167
    %v344 = vunpack.c.h.b16 %v167
    %v345 = vunpack.c.l.b16 %v168
    %v346 = vunpack.c.h.b16 %v168
    %v347 = vunpack.c.l.b16 %v169
    %v348 = vunpack.c.h.b16 %v169
    %v349 = vunpack.c.l.b16 %v170
    %v350 = vunpack.c.h.b16 %v170
    %v351 = vunpack.c.l.b16 %v171
    %v352 = vunpack.c.h.b16 %v171
    %v353 = vunpack.c.l.b16 %v172
    %v354 = vunpack.c.h.b16 %v172
    %v355 = vunpack.c.l.b16 %v173
    %v356 = vunpack.c.h.b16 %v173
    %v357 = vunpack.c.l.b16 %v174
    %v358 = vunpack.c.h.b16 %v174
    %v359 = vunpack.c.l.b16 %v175
    %v360 = vunpack.c.h.b16 %v175
    %v361 = vunpack.c.l.b16 %v176
    %v362 = vunpack.c.h.b16 %v176
    %v363 = vunpack.c.l.b16 %v177
    %v364 = vunpack.c.h.b16 %v177
    %v365 = vunpack.c.l.b16 %v178
    %v366 = vunpack.c.h.b16 %v178
    %v367 = vunpack.c.l.b16 %v179
    %v368 = vunpack.c.h.b16 %v179
    %v369 = vunpack.c.l.b16 %v180
    %v370 = vunpack.c.h.b16 %v180
    %v371 = vunpack.c.l.b16 %v181
    %v372 = vunpack.c.h.b16 %v181
    %v373 = vunpack.c.l.b16 %v182
    %v374 = vunpack.c.h.b16 %v182
    %v375 = vunpack.c.l.b16 %v183
    %v376 = vunpack.c.h.b16 %v183
    %v377 = vunpack.c.l.b16 %v184
    %v378 = vunpack.c.h.b16 %v184
    %v379 = vunpack.c.l.b16 %v185
    %v380 = vunpack.c.h.b16 %v185
    %v381 = vunpack.c.l.b16 %v186
    %v382 = vunpack.c.h.b16 %v186
    %v383 = vunpack.c.l.b16 %v187
    %v384 = vunpack.c.h.b16 %v187
    %v385 = vunpack.c.l.b16 %v188
    %v386 = vunpack.c.h.b16 %v188
    %v387 = vunpack.c.l.b16 %v189
    %v388 = vunpack.c.h.b16 %v189
    %v389 = vunpack.c.l.b16 %v190
    %v390 = vunpack.c.h.b16 %v190
    %v391 = vunpack.c.l.b16 %v191
    %v392 = vunpack.c.h.b16 %v191
    %v393 = vunpack.c.l.b16 %v192
    %v394 = vunpack.c.h.b16 %v192
    %v395 = vunpack.c.l.b16 %v193
    %v396 = vunpack.c.h.b16 %v193
    %v397 = vunpack.c.l.b16 %v194
    %v398 = vunpack.c.h.b16 %v194
    %v399 = vunpack.c.l.b16 %v195
    %v400 = vunpack.c.h.b16 %v195
    %v401 = vunpack.c.l.b16 %v196
    %v402 = vunpack.c.h.b16 %v196
    %v403 = vunpack.c.l.b16 %v197
    %v404 = vunpack.c.h.b16 %v197
    %v405 = vunpack.c.l.b16 %v198
    %v406 = vunpack.c.h.b16 %v198
    %v407 = vunpack.c.l.b16 %v199
    %v408 = vunpack.c.h.b16 %v199
    %v409 = vunpack.c.l.b16 %v200
    %v410 = vunpack.c.h.b16 %v200
    %v411 = vunpack.c.l.b16 %v201
    %v412 = vunpack.c.h.b16 %v201
    %v413 = vunpack.c.l.b16 %v202
    %v414 = vunpack.c.h.b16 %v202
    %v415 = vunpack.c.l.b16 %v203
    %v416 = vunpack.c.h.b16 %v203
    %v417 = vunpack.c.l.b16 %v204
    %v418 = vunpack.c.h.b16 %v204
    %v419 = vunpack.c.l.b16 %v205
    %v420 = vunpack.c.h.b16 %v205
    %v421 = vunpack.c.l.b16 %v206
    %v422 = vunpack.c.h.b16 %v206
    %v423 = vunpack.c.l.b16 %v207
    %v424 = vunpack.c.h.b16 %v207
    %v425 = vunpack.c.l.b16 %v208
    %v426 = vunpack.c.h.b16 %v208
    %v427 = vpack.c.b16 %v303, %v299
    %v428 = vpack.c.b16 %v304, %v300
    %v429 = vpack.c.b16 %v305, %v301
    %v430 = vpack.c.b16 %v306, %v302
    %v431 = vpack.c.b16 %v311, %v307
    %v432 = vpack.c.b16 %v312, %v308
    %v433 = vpack.c.b16 %v313, %v309
    %v434 = vpack.c.b16 %v314, %v310
    %v435 = vpack.c.b16 %v319, %v315
    %v436 = vpack.c.b16 %v320, %v316
    %v437 = vpack.c.b16 %v321, %v317
    %v438 = vpack.c.b16 %v322, %v318
    %v439 = vpack.c.b16 %v327, %v323
    %v440 = vpack.c.b16 %v328, %v324
    %v441 = vpack.c.b16 %v329, %v325
    %v442 = vpack.c.b16 %v330, %v326
    %v443 = vpack.c.b16 %v335, %v331
    %v444 = vpack.c.b16 %v336, %v332
    %v445 = vpack.c.b16 %v337, %v333
    %v446 = vpack.c.b16 %v338, %v334
    %v447 = vpack.c.b16 %v343, %v339
    %v448 = vpack.c.b16 %v344, %v340
    %v449 = vpack.c.b16 %v345, %v341
    %v450 = vpack.c.b16 %v346, %v342
    %v451 = vpack.c.b16 %v351, %v347
    %v452 = vpack.c.b16 %v352, %v348
    %v453 = vpack.c.b16 %v353, %v349
    %v454 = vpack.c.b16 %v354, %v350
    %v455 = vpack.c.b16 %v359, %v355
    %v456 = vpack.c.b16 %v360, %v356
    %v457 = vpack.c.b16 %v361, %v357
    %v458 = vpack.c.b16 %v362, %v358
    %v459 = vpack.c.b16 %v367, %v363
    %v460 = vpack.c.b16 %v368, %v364
    %v461 = vpack.c.b16 %v369, %v365
    %v462 = vpack.c.b16 %v370, %v366
    %v463 = vpack.c.b16 %v375, %v371
    %v464 = vpack.c.b16 %v376, %v372
    %v465 = vpack.c.b16 %v377, %v373
    %v466 = vpack.c.b16 %v378, %v374
    %v467 = vpack.c.b16 %v383, %v379
    %v468 = vpack.c.b16 %v384, %v380
    %v469 = vpack.c.b16 %v385, %v381
    %v470 = vpack.c.b16 %v386, %v382
    %v471 = vpack.c.b16 %v391, %v387
    %v472 = vpack.c.b16 %v392, %v388
    %v473 = vpack.c.b16 %v393, %v389
    %v474 = vpack.c.b16 %v394, %v390
    %v475 = vpack.c.b16 %v399, %v395
    %v476 = vpack.c.b16 %v400, %v396
    %v477 = vpack.c.b16 %v401, %v397
    %v478 = vpack.c.b16 %v402, %v398
    %v479 = vpack.c.b16 %v407, %v403
    %v480 = vpack.c.b16 %v408, %v404
    %v481 = vpack.c.b16 %v409, %v405
    %v482 = vpack.c.b16 %v410, %v406
    %v483 = vpack.c.b16 %v415, %v411
    %v484 = vpack.c.b16 %v416, %v412
    %v485 = vpack.c.b16 %v417, %v413
    %v486 = vpack.c.b16 %v418, %v414
    %v487 = vpack.c.b16 %v423, %v419
    %v488 = vpack.c.b16 %v424, %v420
    %v489 = vpack.c.b16 %v425, %v421
    %v490 = vpack.c.b16 %v426, %v422
    %555 = vmatprep.subr.bf16.mxu0 %v456
    %556 = vmatpush1.bf16.msra.mxu0 %v455
    %557 = vmatprep.subr.bf16.mxu0 %v452
    %558 = vmatpush1.bf16.msra.mxu0 %v451
    %559 = vmatprep.subr.bf16.mxu0 %v448
    %560 = vmatpush1.bf16.msra.mxu0 %v447
    %561 = vmatprep.subr.bf16.mxu0 %v444
    %562 = vmatpush1.bf16.msra.mxu0 %v443
    %563 = vmatprep.subr.bf16.mxu0 %v440
    %564 = vmatpush1.bf16.msra.mxu0 %v439
    %565 = vmatprep.subr.bf16.mxu0 %v436
    %566 = vmatpush1.bf16.msra.mxu0 %v435
    %567 = vmatprep.subr.bf16.mxu0 %v432
    %568 = vmatpush1.bf16.msra.mxu0 %v431
    %569 = vmatprep.subr.bf16.mxu0 %v428
    %570 = vmatpush1.bf16.msra.mxu0 %v427
    %571 = vmatprep.subr.bf16.mxu0 %v488
    %572 = vmatpush2.bf16.msra.mxu0 %v487
    %573 = vmatprep.subr.bf16.mxu0 %v484
    %574 = vmatpush2.bf16.msra.mxu0 %v483
    %575 = vmatprep.subr.bf16.mxu0 %v480
    %576 = vmatpush2.bf16.msra.mxu0 %v479
    %577 = vmatprep.subr.bf16.mxu0 %v476
    %578 = vmatpush2.bf16.msra.mxu0 %v475
    %579 = vmatprep.subr.bf16.mxu0 %v472
    %580 = vmatpush2.bf16.msra.mxu0 %v471
    %581 = vmatprep.subr.bf16.mxu0 %v468
    %582 = vmatpush2.bf16.msra.mxu0 %v467
    %583 = vmatprep.subr.bf16.mxu0 %v464
    %584 = vmatpush2.bf16.msra.mxu0 %v463
    %585 = vmatprep.subr.bf16.mxu0 %v460
    %586 = vmatpush2.bf16.msra.mxu0 %v459
    %587 = vmatprep.mubr.bf16.mxu0 %v213
    %588 = vmatmul.mubr.bf16.gmra.mxu0 %v212
    %v589 = vpop.f32.mrf.mxu0
    %v590 = vadd.f32 %v218, %v589
    %v591 = vpop.f32.mrf.mxu0
    %v592 = vadd.f32 %v222, %v591
    %v593 = vpop.f32.mrf.mxu0
    %v594 = vpop.f32.mrf.mxu0
    %595 = vdwg.mxu0
    %596 = vmatprep.subr.bf16.mxu0 %v458
    %597 = vmatpush1.bf16.msra.mxu0 %v457
    %598 = vmatprep.subr.bf16.mxu0 %v454
    %599 = vmatpush1.bf16.msra.mxu0 %v453
    %600 = vmatprep.subr.bf16.mxu0 %v450
    %601 = vmatpush1.bf16.msra.mxu0 %v449
    %602 = vmatprep.subr.bf16.mxu0 %v446
    %603 = vmatpush1.bf16.msra.mxu0 %v445
    %604 = vmatprep.subr.bf16.mxu0 %v442
    %605 = vmatpush1.bf16.msra.mxu0 %v441
    %606 = vmatprep.subr.bf16.mxu0 %v438
    %607 = vmatpush1.bf16.msra.mxu0 %v437
    %608 = vmatprep.subr.bf16.mxu0 %v434
    %609 = vmatpush1.bf16.msra.mxu0 %v433
    %610 = vmatprep.subr.bf16.mxu0 %v430
    %611 = vmatpush1.bf16.msra.mxu0 %v429
    %612 = vmatprep.subr.bf16.mxu0 %v490
    %613 = vmatpush2.bf16.msra.mxu0 %v489
    %614 = vmatprep.subr.bf16.mxu0 %v486
    %615 = vmatpush2.bf16.msra.mxu0 %v485
    %616 = vmatprep.subr.bf16.mxu0 %v482
    %617 = vmatpush2.bf16.msra.mxu0 %v481
    %618 = vmatprep.subr.bf16.mxu0 %v478
    %619 = vmatpush2.bf16.msra.mxu0 %v477
    %620 = vmatprep.subr.bf16.mxu0 %v474
    %621 = vmatpush2.bf16.msra.mxu0 %v473
    %622 = vmatprep.subr.bf16.mxu0 %v470
    %623 = vmatpush2.bf16.msra.mxu0 %v469
    %624 = vmatprep.subr.bf16.mxu0 %v466
    %625 = vmatpush2.bf16.msra.mxu0 %v465
    %626 = vmatprep.subr.bf16.mxu0 %v462
    %627 = vmatpush2.bf16.msra.mxu0 %v461
    %628 = vmatprep.mubr.bf16.mxu0 %v213
    %629 = vmatmul.mubr.bf16.gmra.mxu0 %v212
    %v630 = vpop.f32.mrf.mxu0
    %v631 = vadd.f32 %v226, %v630
    %v632 = vpop.f32.mrf.mxu0
    %v633 = vadd.f32 %v230, %v632
    %v634 = vpop.f32.mrf.mxu0
    %v635 = vpop.f32.mrf.mxu0
    %636 = vdwg.mxu0
    %v637 = vxor.u32 %v590, 2147483648
    %v638 = vmul.f32 %v637, 1.442695
    %v639 = vpow.pop %v638
    %v640 = vadd.f32 %v639, 1.0
    %v641 = vrcp.pop %v640
    %v642 = vmul.f32 1.0, %v641
    %v643 = vxor.u32 %v592, 2147483648
    %v644 = vmul.f32 %v643, 1.442695
    %v645 = vpow.pop %v644
    %v646 = vadd.f32 %v645, 1.0
    %v647 = vrcp.pop %v646
    %v648 = vmul.f32 1.0, %v647
    %v649 = vtanh.pop %v631
    %v650 = vxor.u32 %v633, 2147483648
    %v651 = vmul.f32 %v650, 1.442695
    %v652 = vpow.pop %v651
    %v653 = vadd.f32 %v652, 1.0
    %v654 = vrcp.pop %v653
    %v655 = vmul.f32 1.0, %v654
    %v656 = vmul.f32 %v648, %v211
    %v657 = vmul.f32 %v642, %v649
    %v658 = vadd.f32 %v656, %v657
    %v659 = vtanh.pop %v658
    %v660 = vmul.f32 %v655, %v659
    %661 = vst [vmem:[%s13] sm:$0x3] %v660
    %662 = vst [vmem:[%s14] sm:$0x3] %v658
    %v663 = vld [vmem:[#allocation9] sm:$0xff]
    %v664 = vld [vmem:[#allocation9 + $0x8] sm:$0xff]
    %v665 = vld [vmem:[#allocation9 + $0x10] sm:$0xff]
    %v666 = vld [vmem:[#allocation9 + $0x18] sm:$0xff]
    %v667 = vld [vmem:[#allocation9 + $0x20] sm:$0xff]
    %v668 = vld [vmem:[#allocation9 + $0x28] sm:$0xff]
    %v669 = vld [vmem:[#allocation9 + $0x30] sm:$0xff]
    %v670 = vld [vmem:[#allocation9 + $0x38] sm:$0xff]
    %v671 = vld [vmem:[#allocation9 + $0x40] sm:$0xff]
    %v672 = vld [vmem:[#allocation9 + $0x48] sm:$0xff]
    %v673 = vld [vmem:[#allocation9 + $0x50] sm:$0xff]
    %v674 = vld [vmem:[#allocation9 + $0x58] sm:$0xff]
    %v675 = vld [vmem:[#allocation9 + $0x60] sm:$0xff]
    %v676 = vld [vmem:[#allocation9 + $0x68] sm:$0xff]
    %v677 = vld [vmem:[#allocation9 + $0x70] sm:$0xff]
    %v678 = vld [vmem:[#allocation9 + $0x78] sm:$0xff]
    %v679 = vld [vmem:[#allocation9 + $0x80] sm:$0xff]
    %v680 = vld [vmem:[#allocation9 + $0x88] sm:$0xff]
    %v681 = vld [vmem:[#allocation9 + $0x90] sm:$0xff]
    %v682 = vld [vmem:[#allocation9 + $0x98] sm:$0xff]
    %v683 = vld [vmem:[#allocation9 + $0xa0] sm:$0xff]
    %v684 = vld [vmem:[#allocation9 + $0xa8] sm:$0xff]
    %v685 = vld [vmem:[#allocation9 + $0xb0] sm:$0xff]
    %v686 = vld [vmem:[#allocation9 + $0xb8] sm:$0xff]
    %v687 = vld [vmem:[#allocation9 + $0xc0] sm:$0xff]
    %v688 = vld [vmem:[#allocation9 + $0xc8] sm:$0xff]
    %v689 = vld [vmem:[#allocation9 + $0xd0] sm:$0xff]
    %v690 = vld [vmem:[#allocation9 + $0xd8] sm:$0xff]
    %v691 = vld [vmem:[#allocation9 + $0xe0] sm:$0xff]
    %v692 = vld [vmem:[#allocation9 + $0xe8] sm:$0xff]
    %v693 = vld [vmem:[#allocation9 + $0xf0] sm:$0xff]
    %v694 = vld [vmem:[#allocation9 + $0xf8] sm:$0xff]
    %v695 = vld [vmem:[#allocation9 + $0x100] sm:$0xff]
    %v696 = vld [vmem:[#allocation9 + $0x108] sm:$0xff]
    %v697 = vld [vmem:[#allocation9 + $0x110] sm:$0xff]
    %v698 = vld [vmem:[#allocation9 + $0x118] sm:$0xff]
    %v699 = vld [vmem:[#allocation9 + $0x120] sm:$0xff]
    %v700 = vld [vmem:[#allocation9 + $0x128] sm:$0xff]
    %v701 = vld [vmem:[#allocation9 + $0x130] sm:$0xff]
    %v702 = vld [vmem:[#allocation9 + $0x138] sm:$0xff]
    %v703 = vld [vmem:[#allocation9 + $0x140] sm:$0xff]
    %v704 = vld [vmem:[#allocation9 + $0x148] sm:$0xff]
    %v705 = vld [vmem:[#allocation9 + $0x150] sm:$0xff]
    %v706 = vld [vmem:[#allocation9 + $0x158] sm:$0xff]
    %v707 = vld [vmem:[#allocation9 + $0x160] sm:$0xff]
    %v708 = vld [vmem:[#allocation9 + $0x168] sm:$0xff]
    %v709 = vld [vmem:[#allocation9 + $0x170] sm:$0xff]
    %v710 = vld [vmem:[#allocation9 + $0x178] sm:$0xff]
    %v711 = vld [vmem:[#allocation9 + $0x180] sm:$0xff]
    %v712 = vld [vmem:[#allocation9 + $0x188] sm:$0xff]
    %v713 = vld [vmem:[#allocation9 + $0x190] sm:$0xff]
    %v714 = vld [vmem:[#allocation9 + $0x198] sm:$0xff]
    %v715 = vld [vmem:[#allocation9 + $0x1a0] sm:$0xff]
    %v716 = vld [vmem:[#allocation9 + $0x1a8] sm:$0xff]
    %v717 = vld [vmem:[#allocation9 + $0x1b0] sm:$0xff]
    %v718 = vld [vmem:[#allocation9 + $0x1b8] sm:$0xff]
    %v719 = vld [vmem:[#allocation9 + $0x1c0] sm:$0xff]
    %v720 = vld [vmem:[#allocation9 + $0x1c8] sm:$0xff]
    %v721 = vld [vmem:[#allocation9 + $0x1d0] sm:$0xff]
    %v722 = vld [vmem:[#allocation9 + $0x1d8] sm:$0xff]
    %v723 = vld [vmem:[#allocation9 + $0x1e0] sm:$0xff]
    %v724 = vld [vmem:[#allocation9 + $0x1e8] sm:$0xff]
    %v725 = vld [vmem:[#allocation9 + $0x1f0] sm:$0xff]
    %v726 = vld [vmem:[#allocation9 + $0x1f8] sm:$0xff]
    %v727 = vld [vmem:[#allocation10] sm:$0xf]
    %s728 = scalar_lea.vmem %s1, 2
    %v729 = vld [vmem:[%s728] sm:$0x3]
    %s730 = scalar_lea.vmem %s2, 2
    %v731 = vld [vmem:[%s730] sm:$0x3]
    %v732 = vpack.c.bf16 %v660, %v660
    %v733 = vpack.c.bf16 %v729, %v729
    %v735 = vlaneseq
    %v736 = vshrl.u32 %v735, 7
    %v737 = vsub.s32 0, %v736
    %v738 = vrot.slane %v727, %v737
    %v739 = vlaneseq
    %v740 = vshrl.u32 %v739, 7
    %v741 = vsub.s32 1, %v740
    %v742 = vrot.slane %v727, %v741
    %v743 = vlaneseq
    %v744 = vshrl.u32 %v743, 7
    %v745 = vsub.s32 2, %v744
    %v746 = vrot.slane %v727, %v745
    %v747 = vlaneseq
    %v748 = vshrl.u32 %v747, 7
    %v749 = vsub.s32 3, %v748
    %v750 = vrot.slane %v727, %v749
    %v819 = vunpack.c.l.b16 %v663
    %v820 = vunpack.c.h.b16 %v663
    %v821 = vunpack.c.l.b16 %v664
    %v822 = vunpack.c.h.b16 %v664
    %v823 = vunpack.c.l.b16 %v665
    %v824 = vunpack.c.h.b16 %v665
    %v825 = vunpack.c.l.b16 %v666
    %v826 = vunpack.c.h.b16 %v666
    %v827 = vunpack.c.l.b16 %v667
    %v828 = vunpack.c.h.b16 %v667
    %v829 = vunpack.c.l.b16 %v668
    %v830 = vunpack.c.h.b16 %v668
    %v831 = vunpack.c.l.b16 %v669
    %v832 = vunpack.c.h.b16 %v669
    %v833 = vunpack.c.l.b16 %v670
    %v834 = vunpack.c.h.b16 %v670
    %v835 = vunpack.c.l.b16 %v671
    %v836 = vunpack.c.h.b16 %v671
    %v837 = vunpack.c.l.b16 %v672
    %v838 = vunpack.c.h.b16 %v672
    %v839 = vunpack.c.l.b16 %v673
    %v840 = vunpack.c.h.b16 %v673
    %v841 = vunpack.c.l.b16 %v674
    %v842 = vunpack.c.h.b16 %v674
    %v843 = vunpack.c.l.b16 %v675
    %v844 = vunpack.c.h.b16 %v675
    %v845 = vunpack.c.l.b16 %v676
    %v846 = vunpack.c.h.b16 %v676
    %v847 = vunpack.c.l.b16 %v677
    %v848 = vunpack.c.h.b16 %v677
    %v849 = vunpack.c.l.b16 %v678
    %v850 = vunpack.c.h.b16 %v678
    %v851 = vunpack.c.l.b16 %v679
    %v852 = vunpack.c.h.b16 %v679
    %v853 = vunpack.c.l.b16 %v680
    %v854 = vunpack.c.h.b16 %v680
    %v855 = vunpack.c.l.b16 %v681
    %v856 = vunpack.c.h.b16 %v681
    %v857 = vunpack.c.l.b16 %v682
    %v858 = vunpack.c.h.b16 %v682
    %v859 = vunpack.c.l.b16 %v683
    %v860 = vunpack.c.h.b16 %v683
    %v861 = vunpack.c.l.b16 %v684
    %v862 = vunpack.c.h.b16 %v684
    %v863 = vunpack.c.l.b16 %v685
    %v864 = vunpack.c.h.b16 %v685
    %v865 = vunpack.c.l.b16 %v686
    %v866 = vunpack.c.h.b16 %v686
    %v867 = vunpack.c.l.b16 %v687
    %v868 = vunpack.c.h.b16 %v687
    %v869 = vunpack.c.l.b16 %v688
    %v870 = vunpack.c.h.b16 %v688
    %v871 = vunpack.c.l.b16 %v689
    %v872 = vunpack.c.h.b16 %v689
    %v873 = vunpack.c.l.b16 %v690
    %v874 = vunpack.c.h.b16 %v690
    %v875 = vunpack.c.l.b16 %v691
    %v876 = vunpack.c.h.b16 %v691
    %v877 = vunpack.c.l.b16 %v692
    %v878 = vunpack.c.h.b16 %v692
    %v879 = vunpack.c.l.b16 %v693
    %v880 = vunpack.c.h.b16 %v693
    %v881 = vunpack.c.l.b16 %v694
    %v882 = vunpack.c.h.b16 %v694
    %v883 = vunpack.c.l.b16 %v695
    %v884 = vunpack.c.h.b16 %v695
    %v885 = vunpack.c.l.b16 %v696
    %v886 = vunpack.c.h.b16 %v696
    %v887 = vunpack.c.l.b16 %v697
    %v888 = vunpack.c.h.b16 %v697
    %v889 = vunpack.c.l.b16 %v698
    %v890 = vunpack.c.h.b16 %v698
    %v891 = vunpack.c.l.b16 %v699
    %v892 = vunpack.c.h.b16 %v699
    %v893 = vunpack.c.l.b16 %v700
    %v894 = vunpack.c.h.b16 %v700
    %v895 = vunpack.c.l.b16 %v701
    %v896 = vunpack.c.h.b16 %v701
    %v897 = vunpack.c.l.b16 %v702
    %v898 = vunpack.c.h.b16 %v702
    %v899 = vunpack.c.l.b16 %v703
    %v900 = vunpack.c.h.b16 %v703
    %v901 = vunpack.c.l.b16 %v704
    %v902 = vunpack.c.h.b16 %v704
    %v903 = vunpack.c.l.b16 %v705
    %v904 = vunpack.c.h.b16 %v705
    %v905 = vunpack.c.l.b16 %v706
    %v906 = vunpack.c.h.b16 %v706
    %v907 = vunpack.c.l.b16 %v707
    %v908 = vunpack.c.h.b16 %v707
    %v909 = vunpack.c.l.b16 %v708
    %v910 = vunpack.c.h.b16 %v708
    %v911 = vunpack.c.l.b16 %v709
    %v912 = vunpack.c.h.b16 %v709
    %v913 = vunpack.c.l.b16 %v710
    %v914 = vunpack.c.h.b16 %v710
    %v915 = vunpack.c.l.b16 %v711
    %v916 = vunpack.c.h.b16 %v711
    %v917 = vunpack.c.l.b16 %v712
    %v918 = vunpack.c.h.b16 %v712
    %v919 = vunpack.c.l.b16 %v713
    %v920 = vunpack.c.h.b16 %v713
    %v921 = vunpack.c.l.b16 %v714
    %v922 = vunpack.c.h.b16 %v714
    %v923 = vunpack.c.l.b16 %v715
    %v924 = vunpack.c.h.b16 %v715
    %v925 = vunpack.c.l.b16 %v716
    %v926 = vunpack.c.h.b16 %v716
    %v927 = vunpack.c.l.b16 %v717
    %v928 = vunpack.c.h.b16 %v717
    %v929 = vunpack.c.l.b16 %v718
    %v930 = vunpack.c.h.b16 %v718
    %v931 = vunpack.c.l.b16 %v719
    %v932 = vunpack.c.h.b16 %v719
    %v933 = vunpack.c.l.b16 %v720
    %v934 = vunpack.c.h.b16 %v720
    %v935 = vunpack.c.l.b16 %v721
    %v936 = vunpack.c.h.b16 %v721
    %v937 = vunpack.c.l.b16 %v722
    %v938 = vunpack.c.h.b16 %v722
    %v939 = vunpack.c.l.b16 %v723
    %v940 = vunpack.c.h.b16 %v723
    %v941 = vunpack.c.l.b16 %v724
    %v942 = vunpack.c.h.b16 %v724
    %v943 = vunpack.c.l.b16 %v725
    %v944 = vunpack.c.h.b16 %v725
    %v945 = vunpack.c.l.b16 %v726
    %v946 = vunpack.c.h.b16 %v726
    %v947 = vpack.c.b16 %v823, %v819
    %v948 = vpack.c.b16 %v824, %v820
    %v949 = vpack.c.b16 %v825, %v821
    %v950 = vpack.c.b16 %v826, %v822
    %v951 = vpack.c.b16 %v831, %v827
    %v952 = vpack.c.b16 %v832, %v828
    %v953 = vpack.c.b16 %v833, %v829
    %v954 = vpack.c.b16 %v834, %v830
    %v955 = vpack.c.b16 %v839, %v835
    %v956 = vpack.c.b16 %v840, %v836
    %v957 = vpack.c.b16 %v841, %v837
    %v958 = vpack.c.b16 %v842, %v838
    %v959 = vpack.c.b16 %v847, %v843
    %v960 = vpack.c.b16 %v848, %v844
    %v961 = vpack.c.b16 %v849, %v845
    %v962 = vpack.c.b16 %v850, %v846
    %v963 = vpack.c.b16 %v855, %v851
    %v964 = vpack.c.b16 %v856, %v852
    %v965 = vpack.c.b16 %v857, %v853
    %v966 = vpack.c.b16 %v858, %v854
    %v967 = vpack.c.b16 %v863, %v859
    %v968 = vpack.c.b16 %v864, %v860
    %v969 = vpack.c.b16 %v865, %v861
    %v970 = vpack.c.b16 %v866, %v862
    %v971 = vpack.c.b16 %v871, %v867
    %v972 = vpack.c.b16 %v872, %v868
    %v973 = vpack.c.b16 %v873, %v869
    %v974 = vpack.c.b16 %v874, %v870
    %v975 = vpack.c.b16 %v879, %v875
    %v976 = vpack.c.b16 %v880, %v876
    %v977 = vpack.c.b16 %v881, %v877
    %v978 = vpack.c.b16 %v882, %v878
    %v979 = vpack.c.b16 %v887, %v883
    %v980 = vpack.c.b16 %v888, %v884
    %v981 = vpack.c.b16 %v889, %v885
    %v982 = vpack.c.b16 %v890, %v886
    %v983 = vpack.c.b16 %v895, %v891
    %v984 = vpack.c.b16 %v896, %v892
    %v985 = vpack.c.b16 %v897, %v893
    %v986 = vpack.c.b16 %v898, %v894
    %v987 = vpack.c.b16 %v903, %v899
    %v988 = vpack.c.b16 %v904, %v900
    %v989 = vpack.c.b16 %v905, %v901
    %v990 = vpack.c.b16 %v906, %v902
    %v991 = vpack.c.b16 %v911, %v907
    %v992 = vpack.c.b16 %v912, %v908
    %v993 = vpack.c.b16 %v913, %v909
    %v994 = vpack.c.b16 %v914, %v910
    %v995 = vpack.c.b16 %v919, %v915
    %v996 = vpack.c.b16 %v920, %v916
    %v997 = vpack.c.b16 %v921, %v917
    %v998 = vpack.c.b16 %v922, %v918
    %v999 = vpack.c.b16 %v927, %v923
    %v1000 = vpack.c.b16 %v928, %v924
    %v1001 = vpack.c.b16 %v929, %v925
    %v1002 = vpack.c.b16 %v930, %v926
    %v1003 = vpack.c.b16 %v935, %v931
    %v1004 = vpack.c.b16 %v936, %v932
    %v1005 = vpack.c.b16 %v937, %v933
    %v1006 = vpack.c.b16 %v938, %v934
    %v1007 = vpack.c.b16 %v943, %v939
    %v1008 = vpack.c.b16 %v944, %v940
    %v1009 = vpack.c.b16 %v945, %v941
    %v1010 = vpack.c.b16 %v946, %v942
    %1075 = vmatprep.subr.bf16.mxu0 %v976
    %1076 = vmatpush1.bf16.msra.mxu0 %v975
    %1077 = vmatprep.subr.bf16.mxu0 %v972
    %1078 = vmatpush1.bf16.msra.mxu0 %v971
    %1079 = vmatprep.subr.bf16.mxu0 %v968
    %1080 = vmatpush1.bf16.msra.mxu0 %v967
    %1081 = vmatprep.subr.bf16.mxu0 %v964
    %1082 = vmatpush1.bf16.msra.mxu0 %v963
    %1083 = vmatprep.subr.bf16.mxu0 %v960
    %1084 = vmatpush1.bf16.msra.mxu0 %v959
    %1085 = vmatprep.subr.bf16.mxu0 %v956
    %1086 = vmatpush1.bf16.msra.mxu0 %v955
    %1087 = vmatprep.subr.bf16.mxu0 %v952
    %1088 = vmatpush1.bf16.msra.mxu0 %v951
    %1089 = vmatprep.subr.bf16.mxu0 %v948
    %1090 = vmatpush1.bf16.msra.mxu0 %v947
    %1091 = vmatprep.subr.bf16.mxu0 %v1008
    %1092 = vmatpush2.bf16.msra.mxu0 %v1007
    %1093 = vmatprep.subr.bf16.mxu0 %v1004
    %1094 = vmatpush2.bf16.msra.mxu0 %v1003
    %1095 = vmatprep.subr.bf16.mxu0 %v1000
    %1096 = vmatpush2.bf16.msra.mxu0 %v999
    %1097 = vmatprep.subr.bf16.mxu0 %v996
    %1098 = vmatpush2.bf16.msra.mxu0 %v995
    %1099 = vmatprep.subr.bf16.mxu0 %v992
    %1100 = vmatpush2.bf16.msra.mxu0 %v991
    %1101 = vmatprep.subr.bf16.mxu0 %v988
    %1102 = vmatpush2.bf16.msra.mxu0 %v987
    %1103 = vmatprep.subr.bf16.mxu0 %v984
    %1104 = vmatpush2.bf16.msra.mxu0 %v983
    %1105 = vmatprep.subr.bf16.mxu0 %v980
    %1106 = vmatpush2.bf16.msra.mxu0 %v979
    %1107 = vmatprep.mubr.bf16.mxu0 %v733
    %1108 = vmatmul.mubr.bf16.gmra.mxu0 %v732
    %v1109 = vpop.f32.mrf.mxu0
    %v1110 = vadd.f32 %v738, %v1109
    %v1111 = vpop.f32.mrf.mxu0
    %v1112 = vadd.f32 %v742, %v1111
    %v1113 = vpop.f32.mrf.mxu0
    %v1114 = vpop.f32.mrf.mxu0
    %1115 = vdwg.mxu0
    %1116 = vmatprep.subr.bf16.mxu0 %v978
    %1117 = vmatpush1.bf16.msra.mxu0 %v977
    %1118 = vmatprep.subr.bf16.mxu0 %v974
    %1119 = vmatpush1.bf16.msra.mxu0 %v973
    %1120 = vmatprep.subr.bf16.mxu0 %v970
    %1121 = vmatpush1.bf16.msra.mxu0 %v969
    %1122 = vmatprep.subr.bf16.mxu0 %v966
    %1123 = vmatpush1.bf16.msra.mxu0 %v965
    %1124 = vmatprep.subr.bf16.mxu0 %v962
    %1125 = vmatpush1.bf16.msra.mxu0 %v961
    %1126 = vmatprep.subr.bf16.mxu0 %v958
    %1127 = vmatpush1.bf16.msra.mxu0 %v957
    %1128 = vmatprep.subr.bf16.mxu0 %v954
    %1129 = vmatpush1.bf16.msra.mxu0 %v953
    %1130 = vmatprep.subr.bf16.mxu0 %v950
    %1131 = vmatpush1.bf16.msra.mxu0 %v949
    %1132 = vmatprep.subr.bf16.mxu0 %v1010
    %1133 = vmatpush2.bf16.msra.mxu0 %v1009
    %1134 = vmatprep.subr.bf16.mxu0 %v1006
    %1135 = vmatpush2.bf16.msra.mxu0 %v1005
    %1136 = vmatprep.subr.bf16.mxu0 %v1002
    %1137 = vmatpush2.bf16.msra.mxu0 %v1001
    %1138 = vmatprep.subr.bf16.mxu0 %v998
    %1139 = vmatpush2.bf16.msra.mxu0 %v997
    %1140 = vmatprep.subr.bf16.mxu0 %v994
    %1141 = vmatpush2.bf16.msra.mxu0 %v993
    %1142 = vmatprep.subr.bf16.mxu0 %v990
    %1143 = vmatpush2.bf16.msra.mxu0 %v989
    %1144 = vmatprep.subr.bf16.mxu0 %v986
    %1145 = vmatpush2.bf16.msra.mxu0 %v985
    %1146 = vmatprep.subr.bf16.mxu0 %v982
    %1147 = vmatpush2.bf16.msra.mxu0 %v981
    %1148 = vmatprep.mubr.bf16.mxu0 %v733
    %1149 = vmatmul.mubr.bf16.gmra.mxu0 %v732
    %v1150 = vpop.f32.mrf.mxu0
    %v1151 = vadd.f32 %v746, %v1150
    %v1152 = vpop.f32.mrf.mxu0
    %v1153 = vadd.f32 %v750, %v1152
    %v1154 = vpop.f32.mrf.mxu0
    %v1155 = vpop.f32.mrf.mxu0
    %1156 = vdwg.mxu0
    %v1157 = vxor.u32 %v1110, 2147483648
    %v1158 = vmul.f32 %v1157, 1.442695
    %v1159 = vpow.pop %v1158
    %v1160 = vadd.f32 %v1159, 1.0
    %v1161 = vrcp.pop %v1160
    %v1162 = vmul.f32 1.0, %v1161
    %v1163 = vxor.u32 %v1112, 2147483648
    %v1164 = vmul.f32 %v1163, 1.442695
    %v1165 = vpow.pop %v1164
    %v1166 = vadd.f32 %v1165, 1.0
    %v1167 = vrcp.pop %v1166
    %v1168 = vmul.f32 1.0, %v1167
    %v1169 = vtanh.pop %v1151
    %v1170 = vxor.u32 %v1153, 2147483648
    %v1171 = vmul.f32 %v1170, 1.442695
    %v1172 = vpow.pop %v1171
    %v1173 = vadd.f32 %v1172, 1.0
    %v1174 = vrcp.pop %v1173
    %v1175 = vmul.f32 1.0, %v1174
    %v1176 = vmul.f32 %v1168, %v731
    %v1177 = vmul.f32 %v1162, %v1169
    %v1178 = vadd.f32 %v1176, %v1177
    %v1179 = vtanh.pop %v1178
    %v1180 = vmul.f32 %v1175, %v1179
    %s1181 = scalar_lea.vmem %s13, 2
    %1182 = vst [vmem:[%s1181] sm:$0x3] %v1180
    %s1183 = scalar_lea.vmem %s14, 2
    %1184 = vst [vmem:[%s1183] sm:$0x3] %v1178
    %s1185 = smul.u32 4, 2
    %s1186 = smul.u32 %s1185, 16
    %s1187 = smul.u32 %s1186, 1
    %s1188 = sshll.u32 %s1187, 4
    %1189 = dma.done [#allocation3], %s1188
    %v1190 = vld [vmem:[#allocation2] sm:$0xf]
    %v1191 = vld [vmem:[#allocation2 + $0x4] sm:$0xf]
    %v1192 = vld [vmem:[#allocation2 + $0x8] sm:$0xf]
    %v1193 = vld [vmem:[#allocation2 + $0xc] sm:$0xf]
    %v1194 = vld [vmem:[#allocation2 + $0x10] sm:$0xf]
    %v1195 = vld [vmem:[#allocation2 + $0x14] sm:$0xf]
    %v1196 = vld [vmem:[#allocation2 + $0x18] sm:$0xf]
    %v1197 = vld [vmem:[#allocation2 + $0x1c] sm:$0xf]
    %v1198 = vld [vmem:[#allocation2 + $0x20] sm:$0xf]
    %v1199 = vld [vmem:[#allocation2 + $0x24] sm:$0xf]
    %v1200 = vld [vmem:[#allocation2 + $0x28] sm:$0xf]
    %v1201 = vld [vmem:[#allocation2 + $0x2c] sm:$0xf]
    %v1202 = vld [vmem:[#allocation2 + $0x30] sm:$0xf]
    %v1203 = vld [vmem:[#allocation2 + $0x34] sm:$0xf]
    %v1204 = vld [vmem:[#allocation2 + $0x38] sm:$0xf]
    %v1205 = vld [vmem:[#allocation2 + $0x3c] sm:$0xf]
    %v1206 = vld [vmem:[#allocation2 + $0x40] sm:$0xf]
    %v1207 = vld [vmem:[#allocation2 + $0x44] sm:$0xf]
    %v1208 = vld [vmem:[#allocation2 + $0x48] sm:$0xf]
    %v1209 = vld [vmem:[#allocation2 + $0x4c] sm:$0xf]
    %v1210 = vld [vmem:[#allocation2 + $0x50] sm:$0xf]
    %v1211 = vld [vmem:[#allocation2 + $0x54] sm:$0xf]
    %v1212 = vld [vmem:[#allocation2 + $0x58] sm:$0xf]
    %v1213 = vld [vmem:[#allocation2 + $0x5c] sm:$0xf]
    %v1214 = vld [vmem:[#allocation2 + $0x60] sm:$0xf]
    %v1215 = vld [vmem:[#allocation2 + $0x64] sm:$0xf]
    %v1216 = vld [vmem:[#allocation2 + $0x68] sm:$0xf]
    %v1217 = vld [vmem:[#allocation2 + $0x6c] sm:$0xf]
    %v1218 = vld [vmem:[#allocation2 + $0x70] sm:$0xf]
    %v1219 = vld [vmem:[#allocation2 + $0x74] sm:$0xf]
    %v1220 = vld [vmem:[#allocation2 + $0x78] sm:$0xf]
    %v1221 = vld [vmem:[#allocation2 + $0x7c] sm:$0xf]
    %v1222 = vpack.c.bf16 %v1180, %v1180
    %v1225 = vunpack.c.l.s4 1966171168
    %v1226 = vunpack.c.0.s8 %v1225
    %v1227 = vlaneseq
    %v1228 = vshrl.u32 %v1227, 7
    %v1229 = vsub.s32 %v1226, %v1228
    %v1230 = vrot.slane %v1222, %v1229
    %v1232 = vunpack.c.l.s4 1966171168
    %v1233 = vunpack.c.0.s8 %v1232
    %v1234 = vlaneseq
    %v1235 = vshrl.u32 %v1234, 7
    %v1236 = vsub.s32 %v1233, %v1235
    %v1237 = vrot.slane %v1230, %v1236
    %v1238 = vunpack.i.l.s16 %v1237
    %v1239 = vunpack.i.h.s16 %v1237
    %v1240 = vpack.i.b16 %v1238, %v1238
    %v1241 = vlaneseq
    %v1242 = vshrl.u32 %v1241, 7
    %v1243 = vsub.s32 0, %v1242
    %v1244 = vrot.slane %v1240, %v1243
    %v1262 = vunpack.c.l.b16 %v1190
    %v1263 = vunpack.c.l.b16 %v1191
    %v1264 = vunpack.c.l.b16 %v1192
    %v1265 = vunpack.c.l.b16 %v1193
    %v1266 = vunpack.c.l.b16 %v1194
    %v1267 = vunpack.c.l.b16 %v1195
    %v1268 = vunpack.c.l.b16 %v1196
    %v1269 = vunpack.c.l.b16 %v1197
    %v1270 = vunpack.c.l.b16 %v1198
    %v1271 = vunpack.c.l.b16 %v1199
    %v1272 = vunpack.c.l.b16 %v1200
    %v1273 = vunpack.c.l.b16 %v1201
    %v1274 = vunpack.c.l.b16 %v1202
    %v1275 = vunpack.c.l.b16 %v1203
    %v1276 = vunpack.c.l.b16 %v1204
    %v1277 = vunpack.c.l.b16 %v1205
    %v1278 = vpack.c.b16 %v1263, %v1262
    %v1279 = vpack.c.b16 %v1265, %v1264
    %v1280 = vpack.c.b16 %v1267, %v1266
    %v1281 = vpack.c.b16 %v1269, %v1268
    %v1282 = vpack.c.b16 %v1271, %v1270
    %v1283 = vpack.c.b16 %v1273, %v1272
    %v1284 = vpack.c.b16 %v1275, %v1274
    %v1285 = vpack.c.b16 %v1277, %v1276
    %1294 = vmatprep.subr.bf16.mxu0 0
    %1295 = vmatpush1.bf16.xpose.msra.mxu0 %v1285
    %1296 = vmatprep.subr.bf16.mxu0 0
    %1297 = vmatpush1.bf16.xpose.msra.mxu0 %v1284
    %1298 = vmatprep.subr.bf16.mxu0 0
    %1299 = vmatpush1.bf16.xpose.msra.mxu0 %v1283
    %1300 = vmatprep.subr.bf16.mxu0 0
    %1301 = vmatpush1.bf16.xpose.msra.mxu0 %v1282
    %1302 = vmatprep.subr.bf16.mxu0 0
    %1303 = vmatpush1.bf16.xpose.msra.mxu0 %v1281
    %1304 = vmatprep.subr.bf16.mxu0 0
    %1305 = vmatpush1.bf16.xpose.msra.mxu0 %v1280
    %1306 = vmatprep.subr.bf16.mxu0 0
    %1307 = vmatpush1.bf16.xpose.msra.mxu0 %v1279
    %1308 = vmatprep.subr.bf16.mxu0 0
    %1309 = vmatpush1.bf16.xpose.msra.mxu0 %v1278
    %1310 = vmatprep.subr.bf16.mxu0 0
    %1311 = vmatpush2.bf16.xpose.msra.mxu0 0
    %1312 = vmatprep.subr.bf16.mxu0 0
    %1313 = vmatpush2.bf16.xpose.msra.mxu0 0
    %1314 = vmatprep.subr.bf16.mxu0 0
    %1315 = vmatpush2.bf16.xpose.msra.mxu0 0
    %1316 = vmatprep.subr.bf16.mxu0 0
    %1317 = vmatpush2.bf16.xpose.msra.mxu0 0
    %1318 = vmatprep.subr.bf16.mxu0 0
    %1319 = vmatpush2.bf16.xpose.msra.mxu0 0
    %1320 = vmatprep.subr.bf16.mxu0 0
    %1321 = vmatpush2.bf16.xpose.msra.mxu0 0
    %1322 = vmatprep.subr.bf16.mxu0 0
    %1323 = vmatpush2.bf16.xpose.msra.mxu0 0
    %1324 = vmatprep.subr.bf16.mxu0 0
    %1325 = vmatpush2.bf16.xpose.msra.mxu0 0
    %1326 = vmatprep.mubr.bf16.mxu0 0
    %1327 = vmatmul.mubr.bf16.gmra.mxu0 %v1244
    %v1328 = vpop.f32.mrf.mxu0
    %v1329 = vadd.f32 0.0, %v1328
    %v1330 = vpop.f32.mrf.mxu0
    %v1331 = vpop.f32.mrf.mxu0
    %v1332 = vpop.f32.mrf.mxu0
    %1333 = vdwg.mxu0
    %v1334 = vpack.i.b16 %v1239, %v1239
    %v1335 = vlaneseq
    %v1336 = vshrl.u32 %v1335, 7
    %v1337 = vsub.s32 0, %v1336
    %v1338 = vrot.slane %v1334, %v1337
    %v1356 = vunpack.c.l.b16 %v1206
    %v1357 = vunpack.c.l.b16 %v1207
    %v1358 = vunpack.c.l.b16 %v1208
    %v1359 = vunpack.c.l.b16 %v1209
    %v1360 = vunpack.c.l.b16 %v1210
    %v1361 = vunpack.c.l.b16 %v1211
    %v1362 = vunpack.c.l.b16 %v1212
    %v1363 = vunpack.c.l.b16 %v1213
    %v1364 = vunpack.c.l.b16 %v1214
    %v1365 = vunpack.c.l.b16 %v1215
    %v1366 = vunpack.c.l.b16 %v1216
    %v1367 = vunpack.c.l.b16 %v1217
    %v1368 = vunpack.c.l.b16 %v1218
    %v1369 = vunpack.c.l.b16 %v1219
    %v1370 = vunpack.c.l.b16 %v1220
    %v1371 = vunpack.c.l.b16 %v1221
    %v1372 = vpack.c.b16 %v1357, %v1356
    %v1373 = vpack.c.b16 %v1359, %v1358
    %v1374 = vpack.c.b16 %v1361, %v1360
    %v1375 = vpack.c.b16 %v1363, %v1362
    %v1376 = vpack.c.b16 %v1365, %v1364
    %v1377 = vpack.c.b16 %v1367, %v1366
    %v1378 = vpack.c.b16 %v1369, %v1368
    %v1379 = vpack.c.b16 %v1371, %v1370
    %1388 = vmatprep.subr.bf16.mxu0 0
    %1389 = vmatpush1.bf16.xpose.msra.mxu0 %v1379
    %1390 = vmatprep.subr.bf16.mxu0 0
    %1391 = vmatpush1.bf16.xpose.msra.mxu0 %v1378
    %1392 = vmatprep.subr.bf16.mxu0 0
    %1393 = vmatpush1.bf16.xpose.msra.mxu0 %v1377
    %1394 = vmatprep.subr.bf16.mxu0 0
    %1395 = vmatpush1.bf16.xpose.msra.mxu0 %v1376
    %1396 = vmatprep.subr.bf16.mxu0 0
    %1397 = vmatpush1.bf16.xpose.msra.mxu0 %v1375
    %1398 = vmatprep.subr.bf16.mxu0 0
    %1399 = vmatpush1.bf16.xpose.msra.mxu0 %v1374
    %1400 = vmatprep.subr.bf16.mxu0 0
    %1401 = vmatpush1.bf16.xpose.msra.mxu0 %v1373
    %1402 = vmatprep.subr.bf16.mxu0 0
    %1403 = vmatpush1.bf16.xpose.msra.mxu0 %v1372
    %1404 = vmatprep.subr.bf16.mxu0 0
    %1405 = vmatpush2.bf16.xpose.msra.mxu0 0
    %1406 = vmatprep.subr.bf16.mxu0 0
    %1407 = vmatpush2.bf16.xpose.msra.mxu0 0
    %1408 = vmatprep.subr.bf16.mxu0 0
    %1409 = vmatpush2.bf16.xpose.msra.mxu0 0
    %1410 = vmatprep.subr.bf16.mxu0 0
    %1411 = vmatpush2.bf16.xpose.msra.mxu0 0
    %1412 = vmatprep.subr.bf16.mxu0 0
    %1413 = vmatpush2.bf16.xpose.msra.mxu0 0
    %1414 = vmatprep.subr.bf16.mxu0 0
    %1415 = vmatpush2.bf16.xpose.msra.mxu0 0
    %1416 = vmatprep.subr.bf16.mxu0 0
    %1417 = vmatpush2.bf16.xpose.msra.mxu0 0
    %1418 = vmatprep.subr.bf16.mxu0 0
    %1419 = vmatpush2.bf16.xpose.msra.mxu0 0
    %1420 = vmatprep.mubr.bf16.mxu0 0
    %1421 = vmatmul.mubr.bf16.gmra.mxu0 %v1338
    %v1422 = vpop.f32.mrf.mxu0
    %v1423 = vadd.f32 0.0, %v1422
    %v1424 = vpop.f32.mrf.mxu0
    %v1425 = vpop.f32.mrf.mxu0
    %v1426 = vpop.f32.mrf.mxu0
    %1427 = vdwg.mxu0
    %v1428 = vlaneseq
    %v1429 = vand.u32 %v1428, 127
    %vm1430 = vcmp.lt.s32.totalorder %v1429, 8
    %v1431 = vsel %vm1430, %v1329, -1e+30
    %v1432 = vsel %vm1430, %v1423, -1e+30
    %vm1433 = vcmask 1040384
    %v1434 = vsel %vm1433, %v1431, -inf
    %1435 = vmax.xlane.f32.xlu0 %v1434
    %v1436 = vpop.xlane.xlu0 %1435
    %v1437 = vsel %vm1433, %v1432, -inf
    %1438 = vmax.xlane.f32.xlu0 %v1437
    %v1439 = vpop.xlane.xlu0 %1438
    %v1440 = vsub.f32 %v1431, %v1436
    %v1441 = vsub.f32 %v1432, %v1439
    %v1442 = vmul.f32 %v1440, 1.442695
    %v1443 = vpow.pop %v1442
    %v1444 = vmul.f32 %v1441, 1.442695
    %v1445 = vpow.pop %v1444
    %v1446 = vsel %vm1433, %v1443, 0.0
    %1447 = vadd.xlane.f32.xlu0 %v1446
    %v1448 = vpop.xlane.xlu0 %1447
    %v1449 = vsel %vm1433, %v1445, 0.0
    %1450 = vadd.xlane.f32.xlu0 %v1449
    %v1451 = vpop.xlane.xlu0 %1450
    %v1452 = vrcp.pop %v1448
    %v1453 = vmul.f32 %v1443, %v1452
    %v1454 = vrcp.pop %v1451
    %v1455 = vmul.f32 %v1445, %v1454
    %1456 = vst [vmem:[#allocation17] sm:$0x1] %v1453
    %1457 = vst [vmem:[#allocation17 + $0x1] sm:$0x1] %v1455
    %v1458 = vpack.c.bf16 %v1453, %v1453
    %v1459 = vpack.c.bf16 %v1455, %v1455
    %1460 = vmatprep.subr.bf16.mxu0 0
    %1461 = vmatpush1.bf16.msra.mxu0 %v1285
    %1462 = vmatprep.subr.bf16.mxu0 0
    %1463 = vmatpush1.bf16.msra.mxu0 %v1284
    %1464 = vmatprep.subr.bf16.mxu0 0
    %1465 = vmatpush1.bf16.msra.mxu0 %v1283
    %1466 = vmatprep.subr.bf16.mxu0 0
    %1467 = vmatpush1.bf16.msra.mxu0 %v1282
    %1468 = vmatprep.subr.bf16.mxu0 0
    %1469 = vmatpush1.bf16.msra.mxu0 %v1281
    %1470 = vmatprep.subr.bf16.mxu0 0
    %1471 = vmatpush1.bf16.msra.mxu0 %v1280
    %1472 = vmatprep.subr.bf16.mxu0 0
    %1473 = vmatpush1.bf16.msra.mxu0 %v1279
    %1474 = vmatprep.subr.bf16.mxu0 0
    %1475 = vmatpush1.bf16.msra.mxu0 %v1278
    %1476 = vmatprep.subr.bf16.mxu0 0
    %1477 = vmatpush2.bf16.msra.mxu0 0
    %1478 = vmatprep.subr.bf16.mxu0 0
    %1479 = vmatpush2.bf16.msra.mxu0 0
    %1480 = vmatprep.subr.bf16.mxu0 0
    %1481 = vmatpush2.bf16.msra.mxu0 0
    %1482 = vmatprep.subr.bf16.mxu0 0
    %1483 = vmatpush2.bf16.msra.mxu0 0
    %1484 = vmatprep.subr.bf16.mxu0 0
    %1485 = vmatpush2.bf16.msra.mxu0 0
    %1486 = vmatprep.subr.bf16.mxu0 0
    %1487 = vmatpush2.bf16.msra.mxu0 0
    %1488 = vmatprep.subr.bf16.mxu0 0
    %1489 = vmatpush2.bf16.msra.mxu0 0
    %1490 = vmatprep.subr.bf16.mxu0 0
    %1491 = vmatpush2.bf16.msra.mxu0 0
    %1492 = vmatprep.mubr.bf16.mxu0 0
    %1493 = vmatmul.mubr.bf16.gmra.mxu0 %v1458
    %v1494 = vpop.f32.mrf.mxu0
    %v1495 = vadd.f32 0.0, %v1494
    %v1496 = vpop.f32.mrf.mxu0
    %v1497 = vpop.f32.mrf.mxu0
    %v1498 = vpop.f32.mrf.mxu0
    %1499 = vdwg.mxu0
    %1500 = vmatprep.subr.bf16.mxu0 0
    %1501 = vmatpush1.bf16.msra.mxu0 %v1379
    %1502 = vmatprep.subr.bf16.mxu0 0
    %1503 = vmatpush1.bf16.msra.mxu0 %v1378
    %1504 = vmatprep.subr.bf16.mxu0 0
    %1505 = vmatpush1.bf16.msra.mxu0 %v1377
    %1506 = vmatprep.subr.bf16.mxu0 0
    %1507 = vmatpush1.bf16.msra.mxu0 %v1376
    %1508 = vmatprep.subr.bf16.mxu0 0
    %1509 = vmatpush1.bf16.msra.mxu0 %v1375
    %1510 = vmatprep.subr.bf16.mxu0 0
    %1511 = vmatpush1.bf16.msra.mxu0 %v1374
    %1512 = vmatprep.subr.bf16.mxu0 0
    %1513 = vmatpush1.bf16.msra.mxu0 %v1373
    %1514 = vmatprep.subr.bf16.mxu0 0
    %1515 = vmatpush1.bf16.msra.mxu0 %v1372
    %1516 = vmatprep.subr.bf16.mxu0 0
    %1517 = vmatpush2.bf16.msra.mxu0 0
    %1518 = vmatprep.subr.bf16.mxu0 0
    %1519 = vmatpush2.bf16.msra.mxu0 0
    %1520 = vmatprep.subr.bf16.mxu0 0
    %1521 = vmatpush2.bf16.msra.mxu0 0
    %1522 = vmatprep.subr.bf16.mxu0 0
    %1523 = vmatpush2.bf16.msra.mxu0 0
    %1524 = vmatprep.subr.bf16.mxu0 0
    %1525 = vmatpush2.bf16.msra.mxu0 0
    %1526 = vmatprep.subr.bf16.mxu0 0
    %1527 = vmatpush2.bf16.msra.mxu0 0
    %1528 = vmatprep.subr.bf16.mxu0 0
    %1529 = vmatpush2.bf16.msra.mxu0 0
    %1530 = vmatprep.subr.bf16.mxu0 0
    %1531 = vmatpush2.bf16.msra.mxu0 0
    %1532 = vmatprep.mubr.bf16.mxu0 0
    %1533 = vmatmul.mubr.bf16.gmra.mxu0 %v1459
    %v1534 = vpop.f32.mrf.mxu0
    %v1535 = vadd.f32 0.0, %v1534
    %v1536 = vpop.f32.mrf.mxu0
    %v1537 = vpop.f32.mrf.mxu0
    %v1538 = vpop.f32.mrf.mxu0
    %1539 = vdwg.mxu0
    %v1542 = vrot.slane %v1535, 7
    %vm1543 = vcmask 1041409
    %v1544 = vsel %vm1543, %v1542, %v1495
    %v1546 = vpack.c.bf16 %v1544, %v1544
    %v1547 = vld [vmem:[#allocation12] sm:$0xf]
    %v1548 = vld [vmem:[#allocation12 + $0x4] sm:$0xf]
    %v1549 = vld [vmem:[#allocation12 + $0x8] sm:$0xf]
    %v1550 = vld [vmem:[#allocation12 + $0xc] sm:$0xf]
    %v1551 = vld [vmem:[#allocation12 + $0x10] sm:$0xf]
    %v1552 = vld [vmem:[#allocation12 + $0x14] sm:$0xf]
    %v1553 = vld [vmem:[#allocation12 + $0x18] sm:$0xf]
    %v1554 = vld [vmem:[#allocation12 + $0x1c] sm:$0xf]
    %v1555 = vld [vmem:[#allocation12 + $0x20] sm:$0xf]
    %v1556 = vld [vmem:[#allocation12 + $0x24] sm:$0xf]
    %v1557 = vld [vmem:[#allocation12 + $0x28] sm:$0xf]
    %v1558 = vld [vmem:[#allocation12 + $0x2c] sm:$0xf]
    %v1559 = vld [vmem:[#allocation12 + $0x30] sm:$0xf]
    %v1560 = vld [vmem:[#allocation12 + $0x34] sm:$0xf]
    %v1561 = vld [vmem:[#allocation12 + $0x38] sm:$0xf]
    %v1562 = vld [vmem:[#allocation12 + $0x3c] sm:$0xf]
    %v1563 = vld [vmem:[#allocation12 + $0x40] sm:$0xf]
    %v1564 = vld [vmem:[#allocation12 + $0x44] sm:$0xf]
    %v1565 = vld [vmem:[#allocation12 + $0x48] sm:$0xf]
    %v1566 = vld [vmem:[#allocation12 + $0x4c] sm:$0xf]
    %v1567 = vld [vmem:[#allocation12 + $0x50] sm:$0xf]
    %v1568 = vld [vmem:[#allocation12 + $0x54] sm:$0xf]
    %v1569 = vld [vmem:[#allocation12 + $0x58] sm:$0xf]
    %v1570 = vld [vmem:[#allocation12 + $0x5c] sm:$0xf]
    %v1571 = vld [vmem:[#allocation12 + $0x60] sm:$0xf]
    %v1572 = vld [vmem:[#allocation12 + $0x64] sm:$0xf]
    %v1573 = vld [vmem:[#allocation12 + $0x68] sm:$0xf]
    %v1574 = vld [vmem:[#allocation12 + $0x6c] sm:$0xf]
    %v1575 = vld [vmem:[#allocation12 + $0x70] sm:$0xf]
    %v1576 = vld [vmem:[#allocation12 + $0x74] sm:$0xf]
    %v1577 = vld [vmem:[#allocation12 + $0x78] sm:$0xf]
    %v1578 = vld [vmem:[#allocation12 + $0x7c] sm:$0xf]
    %v1579 = vld [vmem:[#allocation13] sm:$0x1]
    %v1581 = vlaneseq
    %v1582 = vshrl.u32 %v1581, 7
    %v1583 = vsub.s32 0, %v1582
    %v1584 = vrot.slane %v1579, %v1583
    %v1618 = vunpack.c.l.b16 %v1547
    %v1619 = vunpack.c.l.b16 %v1548
    %v1620 = vunpack.c.l.b16 %v1549
    %v1621 = vunpack.c.l.b16 %v1550
    %v1622 = vunpack.c.l.b16 %v1551
    %v1623 = vunpack.c.l.b16 %v1552
    %v1624 = vunpack.c.l.b16 %v1553
    %v1625 = vunpack.c.l.b16 %v1554
    %v1626 = vunpack.c.l.b16 %v1555
    %v1627 = vunpack.c.l.b16 %v1556
    %v1628 = vunpack.c.l.b16 %v1557
    %v1629 = vunpack.c.l.b16 %v1558
    %v1630 = vunpack.c.l.b16 %v1559
    %v1631 = vunpack.c.l.b16 %v1560
    %v1632 = vunpack.c.l.b16 %v1561
    %v1633 = vunpack.c.l.b16 %v1562
    %v1634 = vunpack.c.l.b16 %v1563
    %v1635 = vunpack.c.l.b16 %v1564
    %v1636 = vunpack.c.l.b16 %v1565
    %v1637 = vunpack.c.l.b16 %v1566
    %v1638 = vunpack.c.l.b16 %v1567
    %v1639 = vunpack.c.l.b16 %v1568
    %v1640 = vunpack.c.l.b16 %v1569
    %v1641 = vunpack.c.l.b16 %v1570
    %v1642 = vunpack.c.l.b16 %v1571
    %v1643 = vunpack.c.l.b16 %v1572
    %v1644 = vunpack.c.l.b16 %v1573
    %v1645 = vunpack.c.l.b16 %v1574
    %v1646 = vunpack.c.l.b16 %v1575
    %v1647 = vunpack.c.l.b16 %v1576
    %v1648 = vunpack.c.l.b16 %v1577
    %v1649 = vunpack.c.l.b16 %v1578
    %v1650 = vpack.c.b16 %v1619, %v1618
    %v1651 = vpack.c.b16 %v1621, %v1620
    %v1652 = vpack.c.b16 %v1623, %v1622
    %v1653 = vpack.c.b16 %v1625, %v1624
    %v1654 = vpack.c.b16 %v1627, %v1626
    %v1655 = vpack.c.b16 %v1629, %v1628
    %v1656 = vpack.c.b16 %v1631, %v1630
    %v1657 = vpack.c.b16 %v1633, %v1632
    %v1658 = vpack.c.b16 %v1635, %v1634
    %v1659 = vpack.c.b16 %v1637, %v1636
    %v1660 = vpack.c.b16 %v1639, %v1638
    %v1661 = vpack.c.b16 %v1641, %v1640
    %v1662 = vpack.c.b16 %v1643, %v1642
    %v1663 = vpack.c.b16 %v1645, %v1644
    %v1664 = vpack.c.b16 %v1647, %v1646
    %v1665 = vpack.c.b16 %v1649, %v1648
    %1682 = vmatprep.subr.bf16.mxu0 0
    %1683 = vmatpush1.bf16.msra.mxu0 %v1657
    %1684 = vmatprep.subr.bf16.mxu0 0
    %1685 = vmatpush1.bf16.msra.mxu0 %v1656
    %1686 = vmatprep.subr.bf16.mxu0 0
    %1687 = vmatpush1.bf16.msra.mxu0 %v1655
    %1688 = vmatprep.subr.bf16.mxu0 0
    %1689 = vmatpush1.bf16.msra.mxu0 %v1654
    %1690 = vmatprep.subr.bf16.mxu0 0
    %1691 = vmatpush1.bf16.msra.mxu0 %v1653
    %1692 = vmatprep.subr.bf16.mxu0 0
    %1693 = vmatpush1.bf16.msra.mxu0 %v1652
    %1694 = vmatprep.subr.bf16.mxu0 0
    %1695 = vmatpush1.bf16.msra.mxu0 %v1651
    %1696 = vmatprep.subr.bf16.mxu0 0
    %1697 = vmatpush1.bf16.msra.mxu0 %v1650
    %1698 = vmatprep.subr.bf16.mxu0 0
    %1699 = vmatpush2.bf16.msra.mxu0 %v1665
    %1700 = vmatprep.subr.bf16.mxu0 0
    %1701 = vmatpush2.bf16.msra.mxu0 %v1664
    %1702 = vmatprep.subr.bf16.mxu0 0
    %1703 = vmatpush2.bf16.msra.mxu0 %v1663
    %1704 = vmatprep.subr.bf16.mxu0 0
    %1705 = vmatpush2.bf16.msra.mxu0 %v1662
    %1706 = vmatprep.subr.bf16.mxu0 0
    %1707 = vmatpush2.bf16.msra.mxu0 %v1661
    %1708 = vmatprep.subr.bf16.mxu0 0
    %1709 = vmatpush2.bf16.msra.mxu0 %v1660
    %1710 = vmatprep.subr.bf16.mxu0 0
    %1711 = vmatpush2.bf16.msra.mxu0 %v1659
    %1712 = vmatprep.subr.bf16.mxu0 0
    %1713 = vmatpush2.bf16.msra.mxu0 %v1658
    %1714 = vmatprep.mubr.bf16.mxu0 %v1546
    %1715 = vmatmul.mubr.bf16.gmra.mxu0 %v1222
    %v1716 = vpop.f32.mrf.mxu0
    %v1717 = vadd.f32 %v1584, %v1716
    %v1718 = vpop.f32.mrf.mxu0
    %v1719 = vpop.f32.mrf.mxu0
    %v1720 = vpop.f32.mrf.mxu0
    %1721 = vdwg.mxu0
    %v1722 = vtanh.pop %v1717
    %v1723 = vpack.c.bf16 %v1722, %v1722
    %v1724 = vld [vmem:[%s10] sm:$0xf]
    %v1725 = vld [vmem:[%s10 + $0x4] sm:$0xf]
    %v1726 = vld [vmem:[%s10 + $0x8] sm:$0xf]
    %v1727 = vld [vmem:[%s10 + $0xc] sm:$0xf]
    %v1728 = vld [vmem:[%s10 + $0x10] sm:$0xf]
    %v1729 = vld [vmem:[%s10 + $0x14] sm:$0xf]
    %v1730 = vld [vmem:[%s10 + $0x18] sm:$0xf]
    %v1731 = vld [vmem:[%s10 + $0x1c] sm:$0xf]
    %v1732 = vld [vmem:[%s10 + $0x20] sm:$0xf]
    %v1733 = vld [vmem:[%s10 + $0x24] sm:$0xf]
    %v1734 = vld [vmem:[%s10 + $0x28] sm:$0xf]
    %v1735 = vld [vmem:[%s10 + $0x2c] sm:$0xf]
    %v1736 = vld [vmem:[%s10 + $0x30] sm:$0xf]
    %v1737 = vld [vmem:[%s10 + $0x34] sm:$0xf]
    %v1738 = vld [vmem:[%s10 + $0x38] sm:$0xf]
    %v1739 = vld [vmem:[%s10 + $0x3c] sm:$0xf]
    %v1740 = vld [vmem:[#allocation15] sm:$0x1]
    %v1742 = vlaneseq
    %v1743 = vshrl.u32 %v1742, 7
    %v1744 = vsub.s32 0, %v1743
    %v1745 = vrot.slane %v1740, %v1744
    %v1763 = vunpack.c.l.b16 %v1724
    %v1764 = vunpack.c.l.b16 %v1725
    %v1765 = vunpack.c.l.b16 %v1726
    %v1766 = vunpack.c.l.b16 %v1727
    %v1767 = vunpack.c.l.b16 %v1728
    %v1768 = vunpack.c.l.b16 %v1729
    %v1769 = vunpack.c.l.b16 %v1730
    %v1770 = vunpack.c.l.b16 %v1731
    %v1771 = vunpack.c.l.b16 %v1732
    %v1772 = vunpack.c.l.b16 %v1733
    %v1773 = vunpack.c.l.b16 %v1734
    %v1774 = vunpack.c.l.b16 %v1735
    %v1775 = vunpack.c.l.b16 %v1736
    %v1776 = vunpack.c.l.b16 %v1737
    %v1777 = vunpack.c.l.b16 %v1738
    %v1778 = vunpack.c.l.b16 %v1739
    %v1779 = vpack.c.b16 %v1764, %v1763
    %v1780 = vpack.c.b16 %v1766, %v1765
    %v1781 = vpack.c.b16 %v1768, %v1767
    %v1782 = vpack.c.b16 %v1770, %v1769
    %v1783 = vpack.c.b16 %v1772, %v1771
    %v1784 = vpack.c.b16 %v1774, %v1773
    %v1785 = vpack.c.b16 %v1776, %v1775
    %v1786 = vpack.c.b16 %v1778, %v1777
    %1795 = vmatprep.subr.bf16.mxu0 0
    %1796 = vmatpush1.bf16.msra.mxu0 %v1786
    %1797 = vmatprep.subr.bf16.mxu0 0
    %1798 = vmatpush1.bf16.msra.mxu0 %v1785
    %1799 = vmatprep.subr.bf16.mxu0 0
    %1800 = vmatpush1.bf16.msra.mxu0 %v1784
    %1801 = vmatprep.subr.bf16.mxu0 0
    %1802 = vmatpush1.bf16.msra.mxu0 %v1783
    %1803 = vmatprep.subr.bf16.mxu0 0
    %1804 = vmatpush1.bf16.msra.mxu0 %v1782
    %1805 = vmatprep.subr.bf16.mxu0 0
    %1806 = vmatpush1.bf16.msra.mxu0 %v1781
    %1807 = vmatprep.subr.bf16.mxu0 0
    %1808 = vmatpush1.bf16.msra.mxu0 %v1780
    %1809 = vmatprep.subr.bf16.mxu0 0
    %1810 = vmatpush1.bf16.msra.mxu0 %v1779
    %1811 = vmatprep.subr.bf16.mxu0 0
    %1812 = vmatpush2.bf16.msra.mxu0 0
    %1813 = vmatprep.subr.bf16.mxu0 0
    %1814 = vmatpush2.bf16.msra.mxu0 0
    %1815 = vmatprep.subr.bf16.mxu0 0
    %1816 = vmatpush2.bf16.msra.mxu0 0
    %1817 = vmatprep.subr.bf16.mxu0 0
    %1818 = vmatpush2.bf16.msra.mxu0 0
    %1819 = vmatprep.subr.bf16.mxu0 0
    %1820 = vmatpush2.bf16.msra.mxu0 0
    %1821 = vmatprep.subr.bf16.mxu0 0
    %1822 = vmatpush2.bf16.msra.mxu0 0
    %1823 = vmatprep.subr.bf16.mxu0 0
    %1824 = vmatpush2.bf16.msra.mxu0 0
    %1825 = vmatprep.subr.bf16.mxu0 0
    %1826 = vmatpush2.bf16.msra.mxu0 0
    %1827 = vmatprep.mubr.bf16.mxu0 0
    %1828 = vmatmul.mubr.bf16.gmra.mxu0 %v1723
    %v1829 = vpop.f32.mrf.mxu0
    %v1830 = vadd.f32 %v1745, %v1829
    %v1831 = vpop.f32.mrf.mxu0
    %v1832 = vpop.f32.mrf.mxu0
    %v1833 = vpop.f32.mrf.mxu0
    %1834 = vdwg.mxu0
    %vm1835 = vcmask 1041408
    %v1836 = vsel %vm1835, %v1830, -inf
    %1837 = vmax.xlane.f32.xlu0 %v1836
    %v1838 = vpop.xlane.xlu0 %1837
    %v1839 = vsub.f32 %v1830, %v1838
    %v1840 = vmul.f32 %v1839, 1.442695
    %v1841 = vpow.pop %v1840
    %v1842 = vsel %vm1835, %v1841, 0.0
    %1843 = vadd.xlane.f32.xlu0 %v1842
    %v1844 = vpop.xlane.xlu0 %1843
    %v1845 = vlog2.pop %v1844
    %v1846 = vmul.f32 %v1845, 0.6931472
    %v1847 = vadd.f32 %v1838, %v1846
    %v1848 = vsub.f32 %v1830, %v1847
    %1849 = vst [vmem:[#allocation16] sm:$0x3] %v1848
    // Predicated region
    $region78: #{decoder_forward.1} parent=1 // pred_check
      _
    $region79: #{decoder_forward.1} parent=1 // pred_check_branch
      %1851 = sbr.rel (0) target = $region81
    $region80: #{decoder_forward.1} parent=1 // pred_region
      %s1853 = ssub.s32 32, 32
      %1854 = vsyncadd [#allocation6], %s1853
      %s1856 = sshll.u32 [#allocation16], 4
      %s1857 = int_to_ptr.vmem [resolvable:$true] %s1856
      %1859 = dma.vmem_to_hbm [thread:$0]  %s1857, 32, %s12, [#allocation6]
    $region81: #{decoder_forward.1} parent=1 // pred_fallthru
      _
    // Predicated region
    $region82: #{decoder_forward.1} parent=1 // pred_check
      _
    $region83: #{decoder_forward.1} parent=1 // pred_check_branch
      %1861 = sbr.rel (0) target = $region85
    $region84: #{decoder_forward.1} parent=1 // pred_region
      _
    $region85: #{decoder_forward.1} parent=1 // pred_fallthru
      _
    // Predicated region
    $region86: #{decoder_forward.1} parent=1 // pred_check
      _
    $region87: #{decoder_forward.1} parent=1 // pred_check_branch
      %1863 = sbr.rel (0) target = $region89
    $region88: #{decoder_forward.1} parent=1 // pred_region
      _
    $region89: #{decoder_forward.1} parent=1 // pred_fallthru
      _
    // Predicated region
    $region90: #{decoder_forward.1} parent=1 // pred_check
      _
    $region91: #{decoder_forward.1} parent=1 // pred_check_branch
      %1865 = sbr.rel (0) target = $region93
    $region92: #{decoder_forward.1} parent=1 // pred_region
      %s1867 = ssub.s32 32, 32
      %1868 = vsyncadd [#allocation18], %s1867
      %s1869 = sshll.u32 [#allocation17], 4
      %s1870 = int_to_ptr.vmem [resolvable:$true] %s1869
      %1875 = dma.vmem_to_hbm [thread:$0]  %s1870, 32, %s15, [#allocation18], 16, 16, 1
    $region93: #{decoder_forward.1} parent=1 // pred_fallthru
      _
    // Predicated region
    $region94: #{decoder_forward.1} parent=1 // pred_check
      _
    $region95: #{decoder_forward.1} parent=1 // pred_check_branch
      %1877 = sbr.rel (0) target = $region97
    $region96: #{decoder_forward.1} parent=1 // pred_region
      %1878 = dma.done [#allocation6], 32
    $region97: #{decoder_forward.1} parent=1 // pred_fallthru
      _
    // Predicated region
    $region98: #{decoder_forward.1} parent=1 // pred_check
      _
    $region99: #{decoder_forward.1} parent=1 // pred_check_branch
      %1880 = sbr.rel (0) target = $region101
    $region100: #{decoder_forward.1} parent=1 // pred_region
      _
    $region101: #{decoder_forward.1} parent=1 // pred_fallthru
      _
    // Predicated region
    $region102: #{decoder_forward.1} parent=1 // pred_check
      _
    $region103: #{decoder_forward.1} parent=1 // pred_check_branch
      %1882 = sbr.rel (0) target = $region105
    $region104: #{decoder_forward.1} parent=1 // pred_region
      _
    $region105: #{decoder_forward.1} parent=1 // pred_fallthru
      _
    // Predicated region
    $region106: #{decoder_forward.1} parent=1 // pred_check
      _
    $region107: #{decoder_forward.1} parent=1 // pred_check_branch
      %1884 = sbr.rel (0) target = $region109
    $region108: #{decoder_forward.1} parent=1 // pred_region
      %1885 = dma.done [#allocation18], 32
    $region109: #{decoder_forward.1} parent=1 // pred_fallthru
      _
    %1886 = vsyncpa [#allocation5], 1
    %1887 = vsyncpa [#allocation8], 1
    %1888 = vsyncpa [#allocation11], 1
    %1889 = vsyncpa [#allocation14], 1
    %1890 = vsyncpa [#allocation6], 1
    %1891 = vsyncpa [#allocation18], 1
  %1892 = vsyncmov [#allocation3]
  %s1893 = vpop.sfrf %1892
  %p1894 = scmp.eq.s32.totalorder %s1893, 0
  %p1895 = pneg %p1894
  %1897 = shalt.err (%p1895)

</llo_original>
